<compile_context>
chip_gen: v7x
topology: tpu7x:2x2x1
jax: 0.10.0
libtpu: 0.0.40
codegen_flags: <defaults>
</compile_context>

<pallas_src>
import math

import jax
import jax.numpy as jnp
from jax.experimental import pallas as pl
from jax.experimental.pallas import tpu as pltpu

EPS = 1e-5   # nn.BatchNorm1d default eps
PAD = 8      # sublane-aligned shift halo; must be >= max(kernel_size) - 1


def _cdiv(a, b):
    return -(-a // b)


def _pick_tb(B, L, row_bytes, cap_bytes):
    """Batch-chunk size TB: divides B, keeps TB*L sublane-aligned (or covers
    the full row extent), and fits the per-block VMEM budget."""
    best = None
    for d in range(1, B + 1):
        if B % d:
            continue
        aligned = (d * L) % 8 == 0 or d == B
        if aligned and d * L * row_bytes <= cap_bytes:
            best = d
    if best is None:
        best = B   # single full block; rely on vmem_limit for odd configs
    # v7x has 2 TensorCores: allow a 2-way grid split, but only when each
    # step still feeds >= 256 MXU rows (splitting tiny work only hurts).
    if B // best == 1 and B >= 2 and B * L >= 512:
        for d in range(best - 1, 0, -1):
            if (B % d == 0 and (d * L) % 8 == 0 and B // d >= 2
                    and d * L >= 256 and d * L * row_bytes <= cap_bytes):
                return d
    return best


def peptide_cnn_forward(x, layers):
    """x: (B, L, 1280) channels-last; layers: 3 dicts with conv weights
    w:(K, Cin, Cout), b:(Cout,) and BatchNorm1d params gamma/beta/mean/var."""
    if x.ndim != 3:
        raise NotImplementedError("only the 3-D (B, L, C) input path is supported")
    # torch does `v = v.float()`; the MXU path is bf16 anyway, so keep the
    # caller's native 16/32-bit float dtype (halves the dominant DMA bytes).
    if x.dtype not in (jnp.float32, jnp.bfloat16, jnp.float16):
        x = x.astype(jnp.float32)
    B, L, Cin = x.shape

    # ---- fold eval-mode BatchNorm into per-channel scale/shift ---------------
    w = [lyr["w"].astype(jnp.float32) for lyr in layers]     # (K, Cin_l, Cout_l)
    b = [lyr["b"].astype(jnp.float32) for lyr in layers]
    scale, shift = [], []
    for lyr in layers:
        s = lyr["gamma"].astype(jnp.float32) / jnp.sqrt(
            lyr["var"].astype(jnp.float32) + EPS)
        scale.append(s)
        shift.append(lyr["beta"].astype(jnp.float32)
                     - lyr["mean"].astype(jnp.float32) * s)

    K1, K2, K3 = (wi.shape[0] for wi in w)
    C1, C2, C3 = (wi.shape[2] for wi in w)
    L3 = L - (K1 - 1) - (K2 - 1) - (K3 - 1)
    if L3 <= 0:
        raise ValueError(f"sequence too short: L={L} gives L3={L3}")
    assert PAD >= max(K1, K2, K3) - 1, "PAD must cover the conv halo"

    # BN_i(y) = s_i*y + t_i  =>  conv_{i+1}(BN_i(r)) == conv'_{i+1}(r) with
    #   w'[k, c, :] = s_i[c] * w[k, c, :]   and   b' = b + sum_k t_i @ w[k]
    w2f = w[1] * scale[0][None, :, None]
    b2f = b[1] + jnp.einsum("c,kcd->d", shift[0], w[1])
    w3f = w[2] * scale[1][None, :, None]
    b3f = b[2] + jnp.einsum("c,kcd->d", shift[1], w[2])

    # conv1 taps packed into the MXU N dimension: (Cin, K1*C1).
    w1m = jnp.transpose(w[0], (1, 0, 2)).reshape(Cin, K1 * C1).astype(jnp.bfloat16)
    # conv2/conv3 stay im2col: (K*Cin_l, Cout_l); conv3 output columns padded
    # to a multiple of 128 lanes so the kernel stores are lane-dense/unmasked.
    C3P = _cdiv(C3, 128) * 128
    w2m = w2f.reshape(K2 * C1, C2).astype(jnp.bfloat16)
    w3m = jnp.pad(w3f.reshape(K3 * C2, C3),
                  ((0, 0), (0, C3P - C3))).astype(jnp.bfloat16)
    b1m = b[0].reshape(1, C1)                      # epilogues stay f32
    b2m = b2f.reshape(1, C2)
    b3m = jnp.pad(b3f, (0, C3P - C3)).reshape(1, C3P)
    s3m = jnp.pad(scale[2], (0, C3P - C3)).reshape(1, C3P)
    t3m = jnp.pad(shift[2], (0, C3P - C3)).reshape(1, C3P)

    # ---- tiling ---------------------------------------------------------------
    CAP = 6 * 1024 * 1024            # per-step x block budget (v7x-safe)
    TB = _pick_tb(B, L, Cin * x.dtype.itemsize, CAP)
    M = TB * L                       # MXU rows per grid step

    x2d = x.reshape(B * L, Cin)      # row-major collapse => no copy, no pad

    def kernel(x_ref, w1_ref, b1_ref, w2_ref, b2_ref, w3_ref, b3_ref,
               s3_ref, t3_ref, out_ref):
        # The M rows are TB batch elements of L rows each.  Rows near each
        # element's tail mix with the next element's rows; those outputs are
        # garbage but never feed a valid row and are dropped in the wrapper.

        # -- conv1: taps packed into N (one MXU pass, no (M, K1*Cin) buffer) --
        h0 = x_ref[...].astype(jnp.bfloat16)                        # (M, Cin)
        y1 = jnp.dot(h0, w1_ref[...],
                     preferred_element_type=jnp.float32)            # (M, K1*C1)
        acc1 = y1[:, :C1]
        for k in range(1, K1):
            zk = jnp.concatenate(
                [y1[:, k * C1:(k + 1) * C1],
                 jnp.zeros((PAD, C1), jnp.float32)], axis=0)
            acc1 = acc1 + zk[k:k + M, :]
        h1 = jnp.maximum(acc1 + b1_ref[...], 0.0)                   # BN1 folded

        def conv_relu_im2col(h, w_ref, bias_ref, k_sz):
            c_in = h.shape[-1]
            hp = jnp.concatenate(
                [h.astype(jnp.bfloat16),
                 jnp.zeros((PAD, c_in), jnp.bfloat16)], axis=0)
            hc = jnp.concatenate([hp[k:k + M, :] for k in range(k_sz)], axis=-1)
            y = jnp.dot(hc, w_ref[...], preferred_element_type=jnp.float32)
            return jnp.maximum(y + bias_ref[...], 0.0)

        h2 = conv_relu_im2col(h1, w2_ref, b2_ref, K2)               # BN2 folded
        h3 = conv_relu_im2col(h2, w3_ref, b3_ref, K3)               # (M, C3P)
        out_ref[...] = h3 * s3_ref[...] + t3_ref[...]               # BN3 (eval)

    params = [w1m, b1m, w2m, b2m, w3m, b3m, s3m, t3m]

    def resident(a):
        zeros = (0,) * a.ndim
        return pl.BlockSpec(a.shape, lambda i: zeros)

    out_flat = pl.pallas_call(
        kernel,
        out_shape=jax.ShapeDtypeStruct((B * L, C3P), jnp.float32),
        grid=(B // TB,),
        in_specs=[pl.BlockSpec((M, Cin), lambda i: (i, 0))]
                 + [resident(p) for p in params],
        out_specs=pl.BlockSpec((M, C3P), lambda i: (i, 0)),
        compiler_params=pltpu.CompilerParams(
            dimension_semantics=("parallel",),
            vmem_limit_bytes=32 * 1024 * 1024),
    )(x2d, *params)

    # Tiny XLA epilogue (B*L3*C3 elements): drop garbage tail rows / padded
    # lanes, materialize the torch NCL layout, then apply `v.view(B, L3, -1)`.
    h = out_flat.reshape(B, L, C3P)[:, :L3, :C3]
    return jnp.transpose(h, (0, 2, 1)).reshape(B, L3, C3)


# --- pure-JAX reference (mirrors PyTorch semantics, f32 HIGHEST) --------------
def peptide_cnn_ref(x, layers):
    h = x.astype(jnp.float32)                          # (B, L, Cin) channels-last
    for lyr in layers:
        w = lyr["w"]
        K = w.shape[0]
        l_out = h.shape[1] - K + 1
        acc = jnp.broadcast_to(lyr["b"][None, None, :],
                               (h.shape[0], l_out, w.shape[2])).astype(jnp.float32)
        for k in range(K):
            acc = acc + jnp.einsum("blc,cd->bld", h[:, k:k + l_out, :], w[k],
                                   precision=jax.lax.Precision.HIGHEST,
                                   preferred_element_type=jnp.float32)
        sc = lyr["gamma"] / jnp.sqrt(lyr["var"] + EPS)
        sh = lyr["beta"] - lyr["mean"] * sc
        h = jnp.maximum(acc, 0.0) * sc[None, None, :] + sh[None, None, :]
    B, l_out, c_out = h.shape
    return jnp.transpose(h, (0, 2, 1)).reshape(B, l_out, c_out)


if __name__ == "__main__":
    # Module hyperparameters (conv1 in_channels is hard-coded to 1280).
    B, L = 8, 16
    embedding_dim = 1280
    num_filters = [32, 64, 96]
    kernel_size = [3, 3, 3]
    in_ch = [embedding_dim] + num_filters

    key = jax.random.PRNGKey(0)
    layers = []
    for i in range(3):
        cin = 1280 if i == 0 else in_ch[i]
        cout = in_ch[i + 1]
        K = kernel_size[i]
        key, kw, kb, kg, kbe, km, kv = jax.random.split(key, 7)
        bound = 1.0 / math.sqrt(cin * K)   # PyTorch Conv1d default init scale
        layers.append(dict(
            w=jax.random.uniform(kw, (K, cin, cout), jnp.float32, -bound, bound),
            b=jax.random.uniform(kb, (cout,), jnp.float32, -bound, bound),
            gamma=jax.random.uniform(kg, (cout,), jnp.float32, 0.5, 1.5),
            beta=0.1 * jax.random.normal(kbe, (cout,), jnp.float32),
            mean=0.1 * jax.random.normal(km, (cout,), jnp.float32),
            var=jax.random.uniform(kv, (cout,), jnp.float32, 0.5, 1.5),
        ))

    key, kx = jax.random.split(key)
    x = jax.random.normal(kx, (B, L, embedding_dim), jnp.float32)

    fwd = jax.jit(peptide_cnn_forward)
    out = jax.block_until_ready(fwd(x, layers))
    ref = jax.block_until_ready(peptide_cnn_ref(x, layers))

    L3 = L - sum(k - 1 for k in kernel_size)
    assert out.shape == (B, L3, num_filters[-1]), out.shape
    err = float(jnp.max(jnp.abs(out - ref)))
    tol = 5e-2 * max(1.0, float(jnp.max(jnp.abs(ref))))   # bf16-MXU tolerance
    if err > tol:
        raise AssertionError(
            f"Pallas kernel mismatch vs reference: max|diff|={err} (tol={tol})")
    print("KERNEL_OK")
</pallas_src>

<mosaic_0001>
module attributes {stable_mosaic.version = 11 : i64} {
  func.func @kernel(%arg0: i32, %arg1: memref<128x1280xf32, #tpu.memory_space<vmem>>, %arg2: memref<1280x96xbf16, #tpu.memory_space<vmem>>, %arg3: memref<1x32xf32, #tpu.memory_space<vmem>>, %arg4: memref<96x64xbf16, #tpu.memory_space<vmem>>, %arg5: memref<1x64xf32, #tpu.memory_space<vmem>>, %arg6: memref<192x128xbf16, #tpu.memory_space<vmem>>, %arg7: memref<1x128xf32, #tpu.memory_space<vmem>>, %arg8: memref<1x128xf32, #tpu.memory_space<vmem>>, %arg9: memref<1x128xf32, #tpu.memory_space<vmem>>, %arg10: memref<128x128xf32, #tpu.memory_space<vmem>>) attributes {dimension_semantics = [#tpu.dimension_semantics<parallel>], iteration_bounds = array<i64: 1>, scalar_prefetch = 0 : i64, scratch_operands = 0 : i64, tpu.core_type = #tpu.core_type<tc>, window_params = [{transform_indices = @transform_0, window_bounds = array<i64: 128, 1280>}, {pipeline_mode = #tpu.pipeline_mode<synchronous>, transform_indices = @transform_1, window_bounds = array<i64: 1280, 96>}, {pipeline_mode = #tpu.pipeline_mode<synchronous>, transform_indices = @transform_2, window_bounds = array<i64: 1, 32>}, {pipeline_mode = #tpu.pipeline_mode<synchronous>, transform_indices = @transform_3, window_bounds = array<i64: 96, 64>}, {pipeline_mode = #tpu.pipeline_mode<synchronous>, transform_indices = @transform_4, window_bounds = array<i64: 1, 64>}, {pipeline_mode = #tpu.pipeline_mode<synchronous>, transform_indices = @transform_5, window_bounds = array<i64: 192, 128>}, {pipeline_mode = #tpu.pipeline_mode<synchronous>, transform_indices = @transform_6, window_bounds = array<i64: 1, 128>}, {pipeline_mode = #tpu.pipeline_mode<synchronous>, transform_indices = @transform_7, window_bounds = array<i64: 1, 128>}, {pipeline_mode = #tpu.pipeline_mode<synchronous>, transform_indices = @transform_8, window_bounds = array<i64: 1, 128>}, {transform_indices = @transform_9, window_bounds = array<i64: 128, 128>}]} {
    %c0 = arith.constant 0 : index
    %c0_0 = arith.constant 0 : index
    %0 = vector.load %arg1[%c0, %c0_0] : memref<128x1280xf32, #tpu.memory_space<vmem>>, vector<128x1280xf32>
    %1 = arith.truncf %0 : vector<128x1280xf32> to vector<128x1280xbf16>
    %c0_1 = arith.constant 0 : index
    %c0_2 = arith.constant 0 : index
    %2 = vector.load %arg2[%c0_1, %c0_2] : memref<1280x96xbf16, #tpu.memory_space<vmem>>, vector<1280x96xbf16>
    %cst = arith.constant dense<0.000000e+00> : vector<128x96xf32>
    %3 = tpu.matmul %1, %2, %cst {dimension_numbers = #tpu.dot_dimension_numbers<[1], [0], [0], [1], [0, 0, 1, 1], [], []>} : vector<128x1280xbf16>, vector<1280x96xbf16>, vector<128x96xf32> -> vector<128x96xf32>
    %4 = vector.extract_strided_slice %3 {offsets = [0, 0], sizes = [128, 32], strides = [1, 1]} : vector<128x96xf32> to vector<128x32xf32>
    %5 = vector.extract_strided_slice %3 {offsets = [0, 32], sizes = [128, 32], strides = [1, 1]} : vector<128x96xf32> to vector<128x32xf32>
    %cst_3 = arith.constant 0.000000e+00 : f32
    %6 = vector.broadcast %cst_3 : f32 to vector<8x32xf32>
    %7 = tpu.concatenate %5, %6 in 0 : vector<128x32xf32>, vector<8x32xf32> -> vector<136x32xf32>
    %8 = vector.extract_strided_slice %7 {offsets = [1, 0], sizes = [128, 32], strides = [1, 1]} : vector<136x32xf32> to vector<128x32xf32>
    %9 = arith.addf %4, %8 : vector<128x32xf32>
    %10 = vector.extract_strided_slice %3 {offsets = [0, 64], sizes = [128, 32], strides = [1, 1]} : vector<128x96xf32> to vector<128x32xf32>
    %cst_4 = arith.constant 0.000000e+00 : f32
    %11 = vector.broadcast %cst_4 : f32 to vector<8x32xf32>
    %12 = tpu.concatenate %10, %11 in 0 : vector<128x32xf32>, vector<8x32xf32> -> vector<136x32xf32>
    %13 = vector.extract_strided_slice %12 {offsets = [2, 0], sizes = [128, 32], strides = [1, 1]} : vector<136x32xf32> to vector<128x32xf32>
    %14 = arith.addf %9, %13 : vector<128x32xf32>
    %c0_5 = arith.constant 0 : index
    %c0_6 = arith.constant 0 : index
    %15 = vector.load %arg3[%c0_5, %c0_6] : memref<1x32xf32, #tpu.memory_space<vmem>>, vector<1x32xf32>
    %16 = vector.broadcast %15 : vector<1x32xf32> to vector<128x32xf32>
    %17 = arith.addf %14, %16 : vector<128x32xf32>
    %cst_7 = arith.constant 0.000000e+00 : f32
    %18 = vector.broadcast %cst_7 : f32 to vector<128x32xf32>
    %19 = arith.maximumf %17, %18 : vector<128x32xf32>
    %20 = arith.truncf %19 : vector<128x32xf32> to vector<128x32xbf16>
    %cst_8 = arith.constant 0.000000e+00 : bf16
    %21 = vector.broadcast %cst_8 : bf16 to vector<8x32xbf16>
    %22 = tpu.concatenate %20, %21 in 0 : vector<128x32xbf16>, vector<8x32xbf16> -> vector<136x32xbf16>
    %23 = vector.extract_strided_slice %22 {offsets = [0, 0], sizes = [128, 32], strides = [1, 1]} : vector<136x32xbf16> to vector<128x32xbf16>
    %24 = vector.extract_strided_slice %22 {offsets = [1, 0], sizes = [128, 32], strides = [1, 1]} : vector<136x32xbf16> to vector<128x32xbf16>
    %25 = vector.extract_strided_slice %22 {offsets = [2, 0], sizes = [128, 32], strides = [1, 1]} : vector<136x32xbf16> to vector<128x32xbf16>
    %26 = tpu.concatenate %23, %24, %25 in 1 : vector<128x32xbf16>, vector<128x32xbf16>, vector<128x32xbf16> -> vector<128x96xbf16>
    %c0_9 = arith.constant 0 : index
    %c0_10 = arith.constant 0 : index
    %27 = vector.load %arg4[%c0_9, %c0_10] : memref<96x64xbf16, #tpu.memory_space<vmem>>, vector<96x64xbf16>
    %cst_11 = arith.constant dense<0.000000e+00> : vector<128x64xf32>
    %28 = tpu.matmul %26, %27, %cst_11 {dimension_numbers = #tpu.dot_dimension_numbers<[1], [0], [0], [1], [0, 0, 1, 1], [], []>} : vector<128x96xbf16>, vector<96x64xbf16>, vector<128x64xf32> -> vector<128x64xf32>
    %c0_12 = arith.constant 0 : index
    %c0_13 = arith.constant 0 : index
    %29 = vector.load %arg5[%c0_12, %c0_13] : memref<1x64xf32, #tpu.memory_space<vmem>>, vector<1x64xf32>
    %30 = vector.broadcast %29 : vector<1x64xf32> to vector<128x64xf32>
    %31 = arith.addf %28, %30 : vector<128x64xf32>
    %cst_14 = arith.constant 0.000000e+00 : f32
    %32 = vector.broadcast %cst_14 : f32 to vector<128x64xf32>
    %33 = arith.maximumf %31, %32 : vector<128x64xf32>
    %34 = arith.truncf %33 : vector<128x64xf32> to vector<128x64xbf16>
    %cst_15 = arith.constant 0.000000e+00 : bf16
    %35 = vector.broadcast %cst_15 : bf16 to vector<8x64xbf16>
    %36 = tpu.concatenate %34, %35 in 0 : vector<128x64xbf16>, vector<8x64xbf16> -> vector<136x64xbf16>
    %37 = vector.extract_strided_slice %36 {offsets = [0, 0], sizes = [128, 64], strides = [1, 1]} : vector<136x64xbf16> to vector<128x64xbf16>
    %38 = vector.extract_strided_slice %36 {offsets = [1, 0], sizes = [128, 64], strides = [1, 1]} : vector<136x64xbf16> to vector<128x64xbf16>
    %39 = vector.extract_strided_slice %36 {offsets = [2, 0], sizes = [128, 64], strides = [1, 1]} : vector<136x64xbf16> to vector<128x64xbf16>
    %40 = tpu.concatenate %37, %38, %39 in 1 : vector<128x64xbf16>, vector<128x64xbf16>, vector<128x64xbf16> -> vector<128x192xbf16>
    %c0_16 = arith.constant 0 : index
    %c0_17 = arith.constant 0 : index
    %41 = vector.load %arg6[%c0_16, %c0_17] : memref<192x128xbf16, #tpu.memory_space<vmem>>, vector<192x128xbf16>
    %cst_18 = arith.constant dense<0.000000e+00> : vector<128x128xf32>
    %42 = tpu.matmul %40, %41, %cst_18 {dimension_numbers = #tpu.dot_dimension_numbers<[1], [0], [0], [1], [0, 0, 1, 1], [], []>} : vector<128x192xbf16>, vector<192x128xbf16>, vector<128x128xf32> -> vector<128x128xf32>
    %c0_19 = arith.constant 0 : index
    %c0_20 = arith.constant 0 : index
    %43 = vector.load %arg7[%c0_19, %c0_20] : memref<1x128xf32, #tpu.memory_space<vmem>>, vector<1x128xf32>
    %44 = vector.broadcast %43 : vector<1x128xf32> to vector<128x128xf32>
    %45 = arith.addf %42, %44 : vector<128x128xf32>
    %cst_21 = arith.constant 0.000000e+00 : f32
    %46 = vector.broadcast %cst_21 : f32 to vector<128x128xf32>
    %47 = arith.maximumf %45, %46 : vector<128x128xf32>
    %c0_22 = arith.constant 0 : index
    %c0_23 = arith.constant 0 : index
    %48 = vector.load %arg8[%c0_22, %c0_23] : memref<1x128xf32, #tpu.memory_space<vmem>>, vector<1x128xf32>
    %49 = vector.broadcast %48 : vector<1x128xf32> to vector<128x128xf32>
    %50 = arith.mulf %47, %49 : vector<128x128xf32>
    %c0_24 = arith.constant 0 : index
    %c0_25 = arith.constant 0 : index
    %51 = vector.load %arg9[%c0_24, %c0_25] : memref<1x128xf32, #tpu.memory_space<vmem>>, vector<1x128xf32>
    %52 = vector.broadcast %51 : vector<1x128xf32> to vector<128x128xf32>
    %53 = arith.addf %50, %52 : vector<128x128xf32>
    %c0_26 = arith.constant 0 : index
    %c0_27 = arith.constant 0 : index
    %54 = vector.load %arg10[%c0_26, %c0_27] : memref<128x128xf32, #tpu.memory_space<vmem>>, vector<128x128xf32>
    tpu.vector_store %arg10[%c0_26, %c0_27], %53 {strides = array<i32>} : memref<128x128xf32, #tpu.memory_space<vmem>>, vector<128x128xf32>,
    return
  }
  func.func @transform_0(%arg0: i32) -> (i32, i32) {
    %c0_i32 = arith.constant 0 : i32
    %c0_i32_0 = arith.constant 0 : i32
    return %arg0, %c0_i32 : i32, i32
  }
  func.func @transform_1(%arg0: i32) -> (i32, i32) {
    %c0_i32 = arith.constant 0 : i32
    %c0_i32_0 = arith.constant 0 : i32
    %c0_i32_1 = arith.constant 0 : i32
    return %c0_i32, %c0_i32_0 : i32, i32
  }
  func.func @transform_2(%arg0: i32) -> (i32, i32) {
    %c0_i32 = arith.constant 0 : i32
    %c0_i32_0 = arith.constant 0 : i32
    %c0_i32_1 = arith.constant 0 : i32
    return %c0_i32, %c0_i32_0 : i32, i32
  }
  func.func @transform_3(%arg0: i32) -> (i32, i32) {
    %c0_i32 = arith.constant 0 : i32
    %c0_i32_0 = arith.constant 0 : i32
    %c0_i32_1 = arith.constant 0 : i32
    return %c0_i32, %c0_i32_0 : i32, i32
  }
  func.func @transform_4(%arg0: i32) -> (i32, i32) {
    %c0_i32 = arith.constant 0 : i32
    %c0_i32_0 = arith.constant 0 : i32
    %c0_i32_1 = arith.constant 0 : i32
    return %c0_i32, %c0_i32_0 : i32, i32
  }
  func.func @transform_5(%arg0: i32) -> (i32, i32) {
    %c0_i32 = arith.constant 0 : i32
    %c0_i32_0 = arith.constant 0 : i32
    %c0_i32_1 = arith.constant 0 : i32
    return %c0_i32, %c0_i32_0 : i32, i32
  }
  func.func @transform_6(%arg0: i32) -> (i32, i32) {
    %c0_i32 = arith.constant 0 : i32
    %c0_i32_0 = arith.constant 0 : i32
    %c0_i32_1 = arith.constant 0 : i32
    return %c0_i32, %c0_i32_0 : i32, i32
  }
  func.func @transform_7(%arg0: i32) -> (i32, i32) {
    %c0_i32 = arith.constant 0 : i32
    %c0_i32_0 = arith.constant 0 : i32
    %c0_i32_1 = arith.constant 0 : i32
    return %c0_i32, %c0_i32_0 : i32, i32
  }
  func.func @transform_8(%arg0: i32) -> (i32, i32) {
    %c0_i32 = arith.constant 0 : i32
    %c0_i32_0 = arith.constant 0 : i32
    %c0_i32_1 = arith.constant 0 : i32
    return %c0_i32, %c0_i32_0 : i32, i32
  }
  func.func @transform_9(%arg0: i32) -> (i32, i32) {
    %c0_i32 = arith.constant 0 : i32
    %c0_i32_0 = arith.constant 0 : i32
    return %arg0, %c0_i32 : i32, i32
  }
}

</mosaic_0001>

<llo_original>
// kernel: peptide_cnn_forward.1
$region0: #{peptide_cnn_forward.1}
  #allocation0 [shape = 'u32[]', space=smem, size = 0x4, offset = 0x4, fixed_abs, tag = 'smem constant byte address 0x4 - core index']
  #allocation1 [shape = 'u32[144,128]{1,0:T(1,128)}', space=vmem, size = 0x12000, scoped, tag = 'internal scratch']
  %s0 = inlined_call_operand.vmem [shape: f32[128,1280], index: 0, kind: input, shape index: {}]
  %s1 = inlined_call_operand.vmem [shape: bf16[1280,96], index: 1, kind: input, shape index: {}]
  %s2 = inlined_call_operand.vmem [shape: f32[1,32], index: 2, kind: input, shape index: {}]
  %s3 = inlined_call_operand.vmem [shape: bf16[96,64], index: 3, kind: input, shape index: {}]
  %s4 = inlined_call_operand.vmem [shape: f32[1,64], index: 4, kind: input, shape index: {}]
  %s5 = inlined_call_operand.vmem [shape: bf16[192,128], index: 5, kind: input, shape index: {}]
  %s6 = inlined_call_operand.vmem [shape: f32[1,128], index: 6, kind: input, shape index: {}]
  %s7 = inlined_call_operand.vmem [shape: f32[1,128], index: 7, kind: input, shape index: {}]
  %s8 = inlined_call_operand.vmem [shape: f32[1,128], index: 8, kind: input, shape index: {}]
  %s9 = inlined_call_operand.vmem [shape: f32[128,128], index: 9, kind: output, shape index: {}]
  %s10 = sld [smem:[#allocation0]]
  $region46: #{peptide_cnn_forward.1} parent=0
    _
  %s12 = ssub.s32 1, %s10
  %s13 = scalar_select 0, %s12, %s10
  // Predicated region
  $region2: #{peptide_cnn_forward.1} parent=0 // pred_check
    _
  $region3: #{peptide_cnn_forward.1} parent=0 // pred_check_branch
    %15 = sbr.rel (0) target = $region5
  $region4: #{peptide_cnn_forward.1} parent=0 // pred_region
    _
  $region5: #{peptide_cnn_forward.1} parent=0 // pred_fallthru
    _
  // Predicated region
  $region6: #{peptide_cnn_forward.1} parent=0 // pred_check
    _
  $region7: #{peptide_cnn_forward.1} parent=0 // pred_check_branch
    %17 = sbr.rel (0) target = $region9
  $region8: #{peptide_cnn_forward.1} parent=0 // pred_region
    _
  $region9: #{peptide_cnn_forward.1} parent=0 // pred_fallthru
    _
  // Predicated region
  $region10: #{peptide_cnn_forward.1} parent=0 // pred_check
    _
  $region11: #{peptide_cnn_forward.1} parent=0 // pred_check_branch
    %19 = sbr.rel (0) target = $region13
  $region12: #{peptide_cnn_forward.1} parent=0 // pred_region
    _
  $region13: #{peptide_cnn_forward.1} parent=0 // pred_fallthru
    _
  // Predicated region
  $region14: #{peptide_cnn_forward.1} parent=0 // pred_check
    _
  $region15: #{peptide_cnn_forward.1} parent=0 // pred_check_branch
    %21 = sbr.rel (0) target = $region17
  $region16: #{peptide_cnn_forward.1} parent=0 // pred_region
    _
  $region17: #{peptide_cnn_forward.1} parent=0 // pred_fallthru
    _
  // Predicated region
  $region18: #{peptide_cnn_forward.1} parent=0 // pred_check
    _
  $region19: #{peptide_cnn_forward.1} parent=0 // pred_check_branch
    %23 = sbr.rel (0) target = $region21
  $region20: #{peptide_cnn_forward.1} parent=0 // pred_region
    _
  $region21: #{peptide_cnn_forward.1} parent=0 // pred_fallthru
    _
  // Predicated region
  $region22: #{peptide_cnn_forward.1} parent=0 // pred_check
    _
  $region23: #{peptide_cnn_forward.1} parent=0 // pred_check_branch
    %25 = sbr.rel (0) target = $region25
  $region24: #{peptide_cnn_forward.1} parent=0 // pred_region
    _
  $region25: #{peptide_cnn_forward.1} parent=0 // pred_fallthru
    _
  // Predicated region
  $region26: #{peptide_cnn_forward.1} parent=0 // pred_check
    _
  $region27: #{peptide_cnn_forward.1} parent=0 // pred_check_branch
    %27 = sbr.rel (0) target = $region29
  $region28: #{peptide_cnn_forward.1} parent=0 // pred_region
    _
  $region29: #{peptide_cnn_forward.1} parent=0 // pred_fallthru
    _
  // Predicated region
  $region30: #{peptide_cnn_forward.1} parent=0 // pred_check
    _
  $region31: #{peptide_cnn_forward.1} parent=0 // pred_check_branch
    %29 = sbr.rel (0) target = $region33
  $region32: #{peptide_cnn_forward.1} parent=0 // pred_region
    _
  $region33: #{peptide_cnn_forward.1} parent=0 // pred_fallthru
    _
  // Predicated region
  $region34: #{peptide_cnn_forward.1} parent=0 // pred_check
    _
  $region35: #{peptide_cnn_forward.1} parent=0 // pred_check_branch
    %31 = sbr.rel (0) target = $region37
  $region36: #{peptide_cnn_forward.1} parent=0 // pred_region
    _
  $region37: #{peptide_cnn_forward.1} parent=0 // pred_fallthru
    _
  %v33 = vld [vmem:[%s0] sm:$0xff]
  %v34 = vld [vmem:[%s0 + $0x8] sm:$0xff]
  %v35 = vld [vmem:[%s0 + $0x10] sm:$0xff]
  %v36 = vld [vmem:[%s0 + $0x18] sm:$0xff]
  %v37 = vld [vmem:[%s0 + $0x20] sm:$0xff]
  %v38 = vld [vmem:[%s0 + $0x28] sm:$0xff]
  %v39 = vld [vmem:[%s0 + $0x30] sm:$0xff]
  %v40 = vld [vmem:[%s0 + $0x38] sm:$0xff]
  %v41 = vld [vmem:[%s0 + $0x40] sm:$0xff]
  %v42 = vld [vmem:[%s0 + $0x48] sm:$0xff]
  %v43 = vld [vmem:[%s0 + $0x50] sm:$0xff]
  %v44 = vld [vmem:[%s0 + $0x58] sm:$0xff]
  %v45 = vld [vmem:[%s0 + $0x60] sm:$0xff]
  %v46 = vld [vmem:[%s0 + $0x68] sm:$0xff]
  %v47 = vld [vmem:[%s0 + $0x70] sm:$0xff]
  %v48 = vld [vmem:[%s0 + $0x78] sm:$0xff]
  %v49 = vld [vmem:[%s0 + $0x80] sm:$0xff]
  %v50 = vld [vmem:[%s0 + $0x88] sm:$0xff]
  %v51 = vld [vmem:[%s0 + $0x90] sm:$0xff]
  %v52 = vld [vmem:[%s0 + $0x98] sm:$0xff]
  %v53 = vld [vmem:[%s0 + $0xa0] sm:$0xff]
  %v54 = vld [vmem:[%s0 + $0xa8] sm:$0xff]
  %v55 = vld [vmem:[%s0 + $0xb0] sm:$0xff]
  %v56 = vld [vmem:[%s0 + $0xb8] sm:$0xff]
  %v57 = vld [vmem:[%s0 + $0xc0] sm:$0xff]
  %v58 = vld [vmem:[%s0 + $0xc8] sm:$0xff]
  %v59 = vld [vmem:[%s0 + $0xd0] sm:$0xff]
  %v60 = vld [vmem:[%s0 + $0xd8] sm:$0xff]
  %v61 = vld [vmem:[%s0 + $0xe0] sm:$0xff]
  %v62 = vld [vmem:[%s0 + $0xe8] sm:$0xff]
  %v63 = vld [vmem:[%s0 + $0xf0] sm:$0xff]
  %v64 = vld [vmem:[%s0 + $0xf8] sm:$0xff]
  %v65 = vld [vmem:[%s0 + $0x100] sm:$0xff]
  %v66 = vld [vmem:[%s0 + $0x108] sm:$0xff]
  %v67 = vld [vmem:[%s0 + $0x110] sm:$0xff]
  %v68 = vld [vmem:[%s0 + $0x118] sm:$0xff]
  %v69 = vld [vmem:[%s0 + $0x120] sm:$0xff]
  %v70 = vld [vmem:[%s0 + $0x128] sm:$0xff]
  %v71 = vld [vmem:[%s0 + $0x130] sm:$0xff]
  %v72 = vld [vmem:[%s0 + $0x138] sm:$0xff]
  %v73 = vld [vmem:[%s0 + $0x140] sm:$0xff]
  %v74 = vld [vmem:[%s0 + $0x148] sm:$0xff]
  %v75 = vld [vmem:[%s0 + $0x150] sm:$0xff]
  %v76 = vld [vmem:[%s0 + $0x158] sm:$0xff]
  %v77 = vld [vmem:[%s0 + $0x160] sm:$0xff]
  %v78 = vld [vmem:[%s0 + $0x168] sm:$0xff]
  %v79 = vld [vmem:[%s0 + $0x170] sm:$0xff]
  %v80 = vld [vmem:[%s0 + $0x178] sm:$0xff]
  %v81 = vld [vmem:[%s0 + $0x180] sm:$0xff]
  %v82 = vld [vmem:[%s0 + $0x188] sm:$0xff]
  %v83 = vld [vmem:[%s0 + $0x190] sm:$0xff]
  %v84 = vld [vmem:[%s0 + $0x198] sm:$0xff]
  %v85 = vld [vmem:[%s0 + $0x1a0] sm:$0xff]
  %v86 = vld [vmem:[%s0 + $0x1a8] sm:$0xff]
  %v87 = vld [vmem:[%s0 + $0x1b0] sm:$0xff]
  %v88 = vld [vmem:[%s0 + $0x1b8] sm:$0xff]
  %v89 = vld [vmem:[%s0 + $0x1c0] sm:$0xff]
  %v90 = vld [vmem:[%s0 + $0x1c8] sm:$0xff]
  %v91 = vld [vmem:[%s0 + $0x1d0] sm:$0xff]
  %v92 = vld [vmem:[%s0 + $0x1d8] sm:$0xff]
  %v93 = vld [vmem:[%s0 + $0x1e0] sm:$0xff]
  %v94 = vld [vmem:[%s0 + $0x1e8] sm:$0xff]
  %v95 = vld [vmem:[%s0 + $0x1f0] sm:$0xff]
  %v96 = vld [vmem:[%s0 + $0x1f8] sm:$0xff]
  %v97 = vld [vmem:[%s0 + $0x200] sm:$0xff]
  %v98 = vld [vmem:[%s0 + $0x208] sm:$0xff]
  %v99 = vld [vmem:[%s0 + $0x210] sm:$0xff]
  %v100 = vld [vmem:[%s0 + $0x218] sm:$0xff]
  %v101 = vld [vmem:[%s0 + $0x220] sm:$0xff]
  %v102 = vld [vmem:[%s0 + $0x228] sm:$0xff]
  %v103 = vld [vmem:[%s0 + $0x230] sm:$0xff]
  %v104 = vld [vmem:[%s0 + $0x238] sm:$0xff]
  %v105 = vld [vmem:[%s0 + $0x240] sm:$0xff]
  %v106 = vld [vmem:[%s0 + $0x248] sm:$0xff]
  %v107 = vld [vmem:[%s0 + $0x250] sm:$0xff]
  %v108 = vld [vmem:[%s0 + $0x258] sm:$0xff]
  %v109 = vld [vmem:[%s0 + $0x260] sm:$0xff]
  %v110 = vld [vmem:[%s0 + $0x268] sm:$0xff]
  %v111 = vld [vmem:[%s0 + $0x270] sm:$0xff]
  %v112 = vld [vmem:[%s0 + $0x278] sm:$0xff]
  %v113 = vld [vmem:[%s0 + $0x280] sm:$0xff]
  %v114 = vld [vmem:[%s0 + $0x288] sm:$0xff]
  %v115 = vld [vmem:[%s0 + $0x290] sm:$0xff]
  %v116 = vld [vmem:[%s0 + $0x298] sm:$0xff]
  %v117 = vld [vmem:[%s0 + $0x2a0] sm:$0xff]
  %v118 = vld [vmem:[%s0 + $0x2a8] sm:$0xff]
  %v119 = vld [vmem:[%s0 + $0x2b0] sm:$0xff]
  %v120 = vld [vmem:[%s0 + $0x2b8] sm:$0xff]
  %v121 = vld [vmem:[%s0 + $0x2c0] sm:$0xff]
  %v122 = vld [vmem:[%s0 + $0x2c8] sm:$0xff]
  %v123 = vld [vmem:[%s0 + $0x2d0] sm:$0xff]
  %v124 = vld [vmem:[%s0 + $0x2d8] sm:$0xff]
  %v125 = vld [vmem:[%s0 + $0x2e0] sm:$0xff]
  %v126 = vld [vmem:[%s0 + $0x2e8] sm:$0xff]
  %v127 = vld [vmem:[%s0 + $0x2f0] sm:$0xff]
  %v128 = vld [vmem:[%s0 + $0x2f8] sm:$0xff]
  %v129 = vld [vmem:[%s0 + $0x300] sm:$0xff]
  %v130 = vld [vmem:[%s0 + $0x308] sm:$0xff]
  %v131 = vld [vmem:[%s0 + $0x310] sm:$0xff]
  %v132 = vld [vmem:[%s0 + $0x318] sm:$0xff]
  %v133 = vld [vmem:[%s0 + $0x320] sm:$0xff]
  %v134 = vld [vmem:[%s0 + $0x328] sm:$0xff]
  %v135 = vld [vmem:[%s0 + $0x330] sm:$0xff]
  %v136 = vld [vmem:[%s0 + $0x338] sm:$0xff]
  %v137 = vld [vmem:[%s0 + $0x340] sm:$0xff]
  %v138 = vld [vmem:[%s0 + $0x348] sm:$0xff]
  %v139 = vld [vmem:[%s0 + $0x350] sm:$0xff]
  %v140 = vld [vmem:[%s0 + $0x358] sm:$0xff]
  %v141 = vld [vmem:[%s0 + $0x360] sm:$0xff]
  %v142 = vld [vmem:[%s0 + $0x368] sm:$0xff]
  %v143 = vld [vmem:[%s0 + $0x370] sm:$0xff]
  %v144 = vld [vmem:[%s0 + $0x378] sm:$0xff]
  %v145 = vld [vmem:[%s0 + $0x380] sm:$0xff]
  %v146 = vld [vmem:[%s0 + $0x388] sm:$0xff]
  %v147 = vld [vmem:[%s0 + $0x390] sm:$0xff]
  %v148 = vld [vmem:[%s0 + $0x398] sm:$0xff]
  %v149 = vld [vmem:[%s0 + $0x3a0] sm:$0xff]
  %v150 = vld [vmem:[%s0 + $0x3a8] sm:$0xff]
  %v151 = vld [vmem:[%s0 + $0x3b0] sm:$0xff]
  %v152 = vld [vmem:[%s0 + $0x3b8] sm:$0xff]
  %v153 = vld [vmem:[%s0 + $0x3c0] sm:$0xff]
  %v154 = vld [vmem:[%s0 + $0x3c8] sm:$0xff]
  %v155 = vld [vmem:[%s0 + $0x3d0] sm:$0xff]
  %v156 = vld [vmem:[%s0 + $0x3d8] sm:$0xff]
  %v157 = vld [vmem:[%s0 + $0x3e0] sm:$0xff]
  %v158 = vld [vmem:[%s0 + $0x3e8] sm:$0xff]
  %v159 = vld [vmem:[%s0 + $0x3f0] sm:$0xff]
  %v160 = vld [vmem:[%s0 + $0x3f8] sm:$0xff]
  %v161 = vld [vmem:[%s0 + $0x400] sm:$0xff]
  %v162 = vld [vmem:[%s0 + $0x408] sm:$0xff]
  %v163 = vld [vmem:[%s0 + $0x410] sm:$0xff]
  %v164 = vld [vmem:[%s0 + $0x418] sm:$0xff]
  %v165 = vld [vmem:[%s0 + $0x420] sm:$0xff]
  %v166 = vld [vmem:[%s0 + $0x428] sm:$0xff]
  %v167 = vld [vmem:[%s0 + $0x430] sm:$0xff]
  %v168 = vld [vmem:[%s0 + $0x438] sm:$0xff]
  %v169 = vld [vmem:[%s0 + $0x440] sm:$0xff]
  %v170 = vld [vmem:[%s0 + $0x448] sm:$0xff]
  %v171 = vld [vmem:[%s0 + $0x450] sm:$0xff]
  %v172 = vld [vmem:[%s0 + $0x458] sm:$0xff]
  %v173 = vld [vmem:[%s0 + $0x460] sm:$0xff]
  %v174 = vld [vmem:[%s0 + $0x468] sm:$0xff]
  %v175 = vld [vmem:[%s0 + $0x470] sm:$0xff]
  %v176 = vld [vmem:[%s0 + $0x478] sm:$0xff]
  %v177 = vld [vmem:[%s0 + $0x480] sm:$0xff]
  %v178 = vld [vmem:[%s0 + $0x488] sm:$0xff]
  %v179 = vld [vmem:[%s0 + $0x490] sm:$0xff]
  %v180 = vld [vmem:[%s0 + $0x498] sm:$0xff]
  %v181 = vld [vmem:[%s0 + $0x4a0] sm:$0xff]
  %v182 = vld [vmem:[%s0 + $0x4a8] sm:$0xff]
  %v183 = vld [vmem:[%s0 + $0x4b0] sm:$0xff]
  %v184 = vld [vmem:[%s0 + $0x4b8] sm:$0xff]
  %v185 = vld [vmem:[%s0 + $0x4c0] sm:$0xff]
  %v186 = vld [vmem:[%s0 + $0x4c8] sm:$0xff]
  %v187 = vld [vmem:[%s0 + $0x4d0] sm:$0xff]
  %v188 = vld [vmem:[%s0 + $0x4d8] sm:$0xff]
  %v189 = vld [vmem:[%s0 + $0x4e0] sm:$0xff]
  %v190 = vld [vmem:[%s0 + $0x4e8] sm:$0xff]
  %v191 = vld [vmem:[%s0 + $0x4f0] sm:$0xff]
  %v192 = vld [vmem:[%s0 + $0x4f8] sm:$0xff]
  %v193 = vpack.c.bf16 %v43, %v33
  %v194 = vpack.c.bf16 %v44, %v34
  %v195 = vpack.c.bf16 %v45, %v35
  %v196 = vpack.c.bf16 %v46, %v36
  %v197 = vpack.c.bf16 %v47, %v37
  %v198 = vpack.c.bf16 %v48, %v38
  %v199 = vpack.c.bf16 %v49, %v39
  %v200 = vpack.c.bf16 %v50, %v40
  %v201 = vpack.c.bf16 %v51, %v41
  %v202 = vpack.c.bf16 %v52, %v42
  %v203 = vpack.c.bf16 %v63, %v53
  %v204 = vpack.c.bf16 %v64, %v54
  %v205 = vpack.c.bf16 %v65, %v55
  %v206 = vpack.c.bf16 %v66, %v56
  %v207 = vpack.c.bf16 %v67, %v57
  %v208 = vpack.c.bf16 %v68, %v58
  %v209 = vpack.c.bf16 %v69, %v59
  %v210 = vpack.c.bf16 %v70, %v60
  %v211 = vpack.c.bf16 %v71, %v61
  %v212 = vpack.c.bf16 %v72, %v62
  %v213 = vpack.c.bf16 %v83, %v73
  %v214 = vpack.c.bf16 %v84, %v74
  %v215 = vpack.c.bf16 %v85, %v75
  %v216 = vpack.c.bf16 %v86, %v76
  %v217 = vpack.c.bf16 %v87, %v77
  %v218 = vpack.c.bf16 %v88, %v78
  %v219 = vpack.c.bf16 %v89, %v79
  %v220 = vpack.c.bf16 %v90, %v80
  %v221 = vpack.c.bf16 %v91, %v81
  %v222 = vpack.c.bf16 %v92, %v82
  %v223 = vpack.c.bf16 %v103, %v93
  %v224 = vpack.c.bf16 %v104, %v94
  %v225 = vpack.c.bf16 %v105, %v95
  %v226 = vpack.c.bf16 %v106, %v96
  %v227 = vpack.c.bf16 %v107, %v97
  %v228 = vpack.c.bf16 %v108, %v98
  %v229 = vpack.c.bf16 %v109, %v99
  %v230 = vpack.c.bf16 %v110, %v100
  %v231 = vpack.c.bf16 %v111, %v101
  %v232 = vpack.c.bf16 %v112, %v102
  %v233 = vpack.c.bf16 %v123, %v113
  %v234 = vpack.c.bf16 %v124, %v114
  %v235 = vpack.c.bf16 %v125, %v115
  %v236 = vpack.c.bf16 %v126, %v116
  %v237 = vpack.c.bf16 %v127, %v117
  %v238 = vpack.c.bf16 %v128, %v118
  %v239 = vpack.c.bf16 %v129, %v119
  %v240 = vpack.c.bf16 %v130, %v120
  %v241 = vpack.c.bf16 %v131, %v121
  %v242 = vpack.c.bf16 %v132, %v122
  %v243 = vpack.c.bf16 %v143, %v133
  %v244 = vpack.c.bf16 %v144, %v134
  %v245 = vpack.c.bf16 %v145, %v135
  %v246 = vpack.c.bf16 %v146, %v136
  %v247 = vpack.c.bf16 %v147, %v137
  %v248 = vpack.c.bf16 %v148, %v138
  %v249 = vpack.c.bf16 %v149, %v139
  %v250 = vpack.c.bf16 %v150, %v140
  %v251 = vpack.c.bf16 %v151, %v141
  %v252 = vpack.c.bf16 %v152, %v142
  %v253 = vpack.c.bf16 %v163, %v153
  %v254 = vpack.c.bf16 %v164, %v154
  %v255 = vpack.c.bf16 %v165, %v155
  %v256 = vpack.c.bf16 %v166, %v156
  %v257 = vpack.c.bf16 %v167, %v157
  %v258 = vpack.c.bf16 %v168, %v158
  %v259 = vpack.c.bf16 %v169, %v159
  %v260 = vpack.c.bf16 %v170, %v160
  %v261 = vpack.c.bf16 %v171, %v161
  %v262 = vpack.c.bf16 %v172, %v162
  %v263 = vpack.c.bf16 %v183, %v173
  %v264 = vpack.c.bf16 %v184, %v174
  %v265 = vpack.c.bf16 %v185, %v175
  %v266 = vpack.c.bf16 %v186, %v176
  %v267 = vpack.c.bf16 %v187, %v177
  %v268 = vpack.c.bf16 %v188, %v178
  %v269 = vpack.c.bf16 %v189, %v179
  %v270 = vpack.c.bf16 %v190, %v180
  %v271 = vpack.c.bf16 %v191, %v181
  %v272 = vpack.c.bf16 %v192, %v182
  %v273 = vld [vmem:[%s1] sm:$0xf]
  %v274 = vld [vmem:[%s1 + $0x4] sm:$0xf]
  %v275 = vld [vmem:[%s1 + $0x8] sm:$0xf]
  %v276 = vld [vmem:[%s1 + $0xc] sm:$0xf]
  %v277 = vld [vmem:[%s1 + $0x10] sm:$0xf]
  %v278 = vld [vmem:[%s1 + $0x14] sm:$0xf]
  %v279 = vld [vmem:[%s1 + $0x18] sm:$0xf]
  %v280 = vld [vmem:[%s1 + $0x1c] sm:$0xf]
  %v281 = vld [vmem:[%s1 + $0x20] sm:$0xf]
  %v282 = vld [vmem:[%s1 + $0x24] sm:$0xf]
  %v283 = vld [vmem:[%s1 + $0x28] sm:$0xf]
  %v284 = vld [vmem:[%s1 + $0x2c] sm:$0xf]
  %v285 = vld [vmem:[%s1 + $0x30] sm:$0xf]
  %v286 = vld [vmem:[%s1 + $0x34] sm:$0xf]
  %v287 = vld [vmem:[%s1 + $0x38] sm:$0xf]
  %v288 = vld [vmem:[%s1 + $0x3c] sm:$0xf]
  %v289 = vld [vmem:[%s1 + $0x40] sm:$0xf]
  %v290 = vld [vmem:[%s1 + $0x44] sm:$0xf]
  %v291 = vld [vmem:[%s1 + $0x48] sm:$0xf]
  %v292 = vld [vmem:[%s1 + $0x4c] sm:$0xf]
  %v293 = vld [vmem:[%s1 + $0x50] sm:$0xf]
  %v294 = vld [vmem:[%s1 + $0x54] sm:$0xf]
  %v295 = vld [vmem:[%s1 + $0x58] sm:$0xf]
  %v296 = vld [vmem:[%s1 + $0x5c] sm:$0xf]
  %v297 = vld [vmem:[%s1 + $0x60] sm:$0xf]
  %v298 = vld [vmem:[%s1 + $0x64] sm:$0xf]
  %v299 = vld [vmem:[%s1 + $0x68] sm:$0xf]
  %v300 = vld [vmem:[%s1 + $0x6c] sm:$0xf]
  %v301 = vld [vmem:[%s1 + $0x70] sm:$0xf]
  %v302 = vld [vmem:[%s1 + $0x74] sm:$0xf]
  %v303 = vld [vmem:[%s1 + $0x78] sm:$0xf]
  %v304 = vld [vmem:[%s1 + $0x7c] sm:$0xf]
  %v305 = vld [vmem:[%s1 + $0x80] sm:$0xf]
  %v306 = vld [vmem:[%s1 + $0x84] sm:$0xf]
  %v307 = vld [vmem:[%s1 + $0x88] sm:$0xf]
  %v308 = vld [vmem:[%s1 + $0x8c] sm:$0xf]
  %v309 = vld [vmem:[%s1 + $0x90] sm:$0xf]
  %v310 = vld [vmem:[%s1 + $0x94] sm:$0xf]
  %v311 = vld [vmem:[%s1 + $0x98] sm:$0xf]
  %v312 = vld [vmem:[%s1 + $0x9c] sm:$0xf]
  %v313 = vld [vmem:[%s1 + $0xa0] sm:$0xf]
  %v314 = vld [vmem:[%s1 + $0xa4] sm:$0xf]
  %v315 = vld [vmem:[%s1 + $0xa8] sm:$0xf]
  %v316 = vld [vmem:[%s1 + $0xac] sm:$0xf]
  %v317 = vld [vmem:[%s1 + $0xb0] sm:$0xf]
  %v318 = vld [vmem:[%s1 + $0xb4] sm:$0xf]
  %v319 = vld [vmem:[%s1 + $0xb8] sm:$0xf]
  %v320 = vld [vmem:[%s1 + $0xbc] sm:$0xf]
  %v321 = vld [vmem:[%s1 + $0xc0] sm:$0xf]
  %v322 = vld [vmem:[%s1 + $0xc4] sm:$0xf]
  %v323 = vld [vmem:[%s1 + $0xc8] sm:$0xf]
  %v324 = vld [vmem:[%s1 + $0xcc] sm:$0xf]
  %v325 = vld [vmem:[%s1 + $0xd0] sm:$0xf]
  %v326 = vld [vmem:[%s1 + $0xd4] sm:$0xf]
  %v327 = vld [vmem:[%s1 + $0xd8] sm:$0xf]
  %v328 = vld [vmem:[%s1 + $0xdc] sm:$0xf]
  %v329 = vld [vmem:[%s1 + $0xe0] sm:$0xf]
  %v330 = vld [vmem:[%s1 + $0xe4] sm:$0xf]
  %v331 = vld [vmem:[%s1 + $0xe8] sm:$0xf]
  %v332 = vld [vmem:[%s1 + $0xec] sm:$0xf]
  %v333 = vld [vmem:[%s1 + $0xf0] sm:$0xf]
  %v334 = vld [vmem:[%s1 + $0xf4] sm:$0xf]
  %v335 = vld [vmem:[%s1 + $0xf8] sm:$0xf]
  %v336 = vld [vmem:[%s1 + $0xfc] sm:$0xf]
  %v337 = vld [vmem:[%s1 + $0x100] sm:$0xf]
  %v338 = vld [vmem:[%s1 + $0x104] sm:$0xf]
  %v339 = vld [vmem:[%s1 + $0x108] sm:$0xf]
  %v340 = vld [vmem:[%s1 + $0x10c] sm:$0xf]
  %v341 = vld [vmem:[%s1 + $0x110] sm:$0xf]
  %v342 = vld [vmem:[%s1 + $0x114] sm:$0xf]
  %v343 = vld [vmem:[%s1 + $0x118] sm:$0xf]
  %v344 = vld [vmem:[%s1 + $0x11c] sm:$0xf]
  %v345 = vld [vmem:[%s1 + $0x120] sm:$0xf]
  %v346 = vld [vmem:[%s1 + $0x124] sm:$0xf]
  %v347 = vld [vmem:[%s1 + $0x128] sm:$0xf]
  %v348 = vld [vmem:[%s1 + $0x12c] sm:$0xf]
  %v349 = vld [vmem:[%s1 + $0x130] sm:$0xf]
  %v350 = vld [vmem:[%s1 + $0x134] sm:$0xf]
  %v351 = vld [vmem:[%s1 + $0x138] sm:$0xf]
  %v352 = vld [vmem:[%s1 + $0x13c] sm:$0xf]
  %v353 = vld [vmem:[%s1 + $0x140] sm:$0xf]
  %v354 = vld [vmem:[%s1 + $0x144] sm:$0xf]
  %v355 = vld [vmem:[%s1 + $0x148] sm:$0xf]
  %v356 = vld [vmem:[%s1 + $0x14c] sm:$0xf]
  %v357 = vld [vmem:[%s1 + $0x150] sm:$0xf]
  %v358 = vld [vmem:[%s1 + $0x154] sm:$0xf]
  %v359 = vld [vmem:[%s1 + $0x158] sm:$0xf]
  %v360 = vld [vmem:[%s1 + $0x15c] sm:$0xf]
  %v361 = vld [vmem:[%s1 + $0x160] sm:$0xf]
  %v362 = vld [vmem:[%s1 + $0x164] sm:$0xf]
  %v363 = vld [vmem:[%s1 + $0x168] sm:$0xf]
  %v364 = vld [vmem:[%s1 + $0x16c] sm:$0xf]
  %v365 = vld [vmem:[%s1 + $0x170] sm:$0xf]
  %v366 = vld [vmem:[%s1 + $0x174] sm:$0xf]
  %v367 = vld [vmem:[%s1 + $0x178] sm:$0xf]
  %v368 = vld [vmem:[%s1 + $0x17c] sm:$0xf]
  %v369 = vld [vmem:[%s1 + $0x180] sm:$0xf]
  %v370 = vld [vmem:[%s1 + $0x184] sm:$0xf]
  %v371 = vld [vmem:[%s1 + $0x188] sm:$0xf]
  %v372 = vld [vmem:[%s1 + $0x18c] sm:$0xf]
  %v373 = vld [vmem:[%s1 + $0x190] sm:$0xf]
  %v374 = vld [vmem:[%s1 + $0x194] sm:$0xf]
  %v375 = vld [vmem:[%s1 + $0x198] sm:$0xf]
  %v376 = vld [vmem:[%s1 + $0x19c] sm:$0xf]
  %v377 = vld [vmem:[%s1 + $0x1a0] sm:$0xf]
  %v378 = vld [vmem:[%s1 + $0x1a4] sm:$0xf]
  %v379 = vld [vmem:[%s1 + $0x1a8] sm:$0xf]
  %v380 = vld [vmem:[%s1 + $0x1ac] sm:$0xf]
  %v381 = vld [vmem:[%s1 + $0x1b0] sm:$0xf]
  %v382 = vld [vmem:[%s1 + $0x1b4] sm:$0xf]
  %v383 = vld [vmem:[%s1 + $0x1b8] sm:$0xf]
  %v384 = vld [vmem:[%s1 + $0x1bc] sm:$0xf]
  %v385 = vld [vmem:[%s1 + $0x1c0] sm:$0xf]
  %v386 = vld [vmem:[%s1 + $0x1c4] sm:$0xf]
  %v387 = vld [vmem:[%s1 + $0x1c8] sm:$0xf]
  %v388 = vld [vmem:[%s1 + $0x1cc] sm:$0xf]
  %v389 = vld [vmem:[%s1 + $0x1d0] sm:$0xf]
  %v390 = vld [vmem:[%s1 + $0x1d4] sm:$0xf]
  %v391 = vld [vmem:[%s1 + $0x1d8] sm:$0xf]
  %v392 = vld [vmem:[%s1 + $0x1dc] sm:$0xf]
  %v393 = vld [vmem:[%s1 + $0x1e0] sm:$0xf]
  %v394 = vld [vmem:[%s1 + $0x1e4] sm:$0xf]
  %v395 = vld [vmem:[%s1 + $0x1e8] sm:$0xf]
  %v396 = vld [vmem:[%s1 + $0x1ec] sm:$0xf]
  %v397 = vld [vmem:[%s1 + $0x1f0] sm:$0xf]
  %v398 = vld [vmem:[%s1 + $0x1f4] sm:$0xf]
  %v399 = vld [vmem:[%s1 + $0x1f8] sm:$0xf]
  %v400 = vld [vmem:[%s1 + $0x1fc] sm:$0xf]
  %v401 = vld [vmem:[%s1 + $0x200] sm:$0xf]
  %v402 = vld [vmem:[%s1 + $0x204] sm:$0xf]
  %v403 = vld [vmem:[%s1 + $0x208] sm:$0xf]
  %v404 = vld [vmem:[%s1 + $0x20c] sm:$0xf]
  %v405 = vld [vmem:[%s1 + $0x210] sm:$0xf]
  %v406 = vld [vmem:[%s1 + $0x214] sm:$0xf]
  %v407 = vld [vmem:[%s1 + $0x218] sm:$0xf]
  %v408 = vld [vmem:[%s1 + $0x21c] sm:$0xf]
  %v409 = vld [vmem:[%s1 + $0x220] sm:$0xf]
  %v410 = vld [vmem:[%s1 + $0x224] sm:$0xf]
  %v411 = vld [vmem:[%s1 + $0x228] sm:$0xf]
  %v412 = vld [vmem:[%s1 + $0x22c] sm:$0xf]
  %v413 = vld [vmem:[%s1 + $0x230] sm:$0xf]
  %v414 = vld [vmem:[%s1 + $0x234] sm:$0xf]
  %v415 = vld [vmem:[%s1 + $0x238] sm:$0xf]
  %v416 = vld [vmem:[%s1 + $0x23c] sm:$0xf]
  %v417 = vld [vmem:[%s1 + $0x240] sm:$0xf]
  %v418 = vld [vmem:[%s1 + $0x244] sm:$0xf]
  %v419 = vld [vmem:[%s1 + $0x248] sm:$0xf]
  %v420 = vld [vmem:[%s1 + $0x24c] sm:$0xf]
  %v421 = vld [vmem:[%s1 + $0x250] sm:$0xf]
  %v422 = vld [vmem:[%s1 + $0x254] sm:$0xf]
  %v423 = vld [vmem:[%s1 + $0x258] sm:$0xf]
  %v424 = vld [vmem:[%s1 + $0x25c] sm:$0xf]
  %v425 = vld [vmem:[%s1 + $0x260] sm:$0xf]
  %v426 = vld [vmem:[%s1 + $0x264] sm:$0xf]
  %v427 = vld [vmem:[%s1 + $0x268] sm:$0xf]
  %v428 = vld [vmem:[%s1 + $0x26c] sm:$0xf]
  %v429 = vld [vmem:[%s1 + $0x270] sm:$0xf]
  %v430 = vld [vmem:[%s1 + $0x274] sm:$0xf]
  %v431 = vld [vmem:[%s1 + $0x278] sm:$0xf]
  %v432 = vld [vmem:[%s1 + $0x27c] sm:$0xf]
  %v593 = vunpack.c.l.b16 %v273
  %v594 = vunpack.c.l.b16 %v274
  %v595 = vunpack.c.l.b16 %v275
  %v596 = vunpack.c.l.b16 %v276
  %v597 = vunpack.c.l.b16 %v277
  %v598 = vunpack.c.l.b16 %v278
  %v599 = vunpack.c.l.b16 %v279
  %v600 = vunpack.c.l.b16 %v280
  %v601 = vunpack.c.l.b16 %v281
  %v602 = vunpack.c.l.b16 %v282
  %v603 = vunpack.c.l.b16 %v283
  %v604 = vunpack.c.l.b16 %v284
  %v605 = vunpack.c.l.b16 %v285
  %v606 = vunpack.c.l.b16 %v286
  %v607 = vunpack.c.l.b16 %v287
  %v608 = vunpack.c.l.b16 %v288
  %v609 = vunpack.c.l.b16 %v289
  %v610 = vunpack.c.l.b16 %v290
  %v611 = vunpack.c.l.b16 %v291
  %v612 = vunpack.c.l.b16 %v292
  %v613 = vunpack.c.l.b16 %v293
  %v614 = vunpack.c.l.b16 %v294
  %v615 = vunpack.c.l.b16 %v295
  %v616 = vunpack.c.l.b16 %v296
  %v617 = vunpack.c.l.b16 %v297
  %v618 = vunpack.c.l.b16 %v298
  %v619 = vunpack.c.l.b16 %v299
  %v620 = vunpack.c.l.b16 %v300
  %v621 = vunpack.c.l.b16 %v301
  %v622 = vunpack.c.l.b16 %v302
  %v623 = vunpack.c.l.b16 %v303
  %v624 = vunpack.c.l.b16 %v304
  %v625 = vunpack.c.l.b16 %v305
  %v626 = vunpack.c.l.b16 %v306
  %v627 = vunpack.c.l.b16 %v307
  %v628 = vunpack.c.l.b16 %v308
  %v629 = vunpack.c.l.b16 %v309
  %v630 = vunpack.c.l.b16 %v310
  %v631 = vunpack.c.l.b16 %v311
  %v632 = vunpack.c.l.b16 %v312
  %v633 = vunpack.c.l.b16 %v313
  %v634 = vunpack.c.l.b16 %v314
  %v635 = vunpack.c.l.b16 %v315
  %v636 = vunpack.c.l.b16 %v316
  %v637 = vunpack.c.l.b16 %v317
  %v638 = vunpack.c.l.b16 %v318
  %v639 = vunpack.c.l.b16 %v319
  %v640 = vunpack.c.l.b16 %v320
  %v641 = vunpack.c.l.b16 %v321
  %v642 = vunpack.c.l.b16 %v322
  %v643 = vunpack.c.l.b16 %v323
  %v644 = vunpack.c.l.b16 %v324
  %v645 = vunpack.c.l.b16 %v325
  %v646 = vunpack.c.l.b16 %v326
  %v647 = vunpack.c.l.b16 %v327
  %v648 = vunpack.c.l.b16 %v328
  %v649 = vunpack.c.l.b16 %v329
  %v650 = vunpack.c.l.b16 %v330
  %v651 = vunpack.c.l.b16 %v331
  %v652 = vunpack.c.l.b16 %v332
  %v653 = vunpack.c.l.b16 %v333
  %v654 = vunpack.c.l.b16 %v334
  %v655 = vunpack.c.l.b16 %v335
  %v656 = vunpack.c.l.b16 %v336
  %v657 = vunpack.c.l.b16 %v337
  %v658 = vunpack.c.l.b16 %v338
  %v659 = vunpack.c.l.b16 %v339
  %v660 = vunpack.c.l.b16 %v340
  %v661 = vunpack.c.l.b16 %v341
  %v662 = vunpack.c.l.b16 %v342
  %v663 = vunpack.c.l.b16 %v343
  %v664 = vunpack.c.l.b16 %v344
  %v665 = vunpack.c.l.b16 %v345
  %v666 = vunpack.c.l.b16 %v346
  %v667 = vunpack.c.l.b16 %v347
  %v668 = vunpack.c.l.b16 %v348
  %v669 = vunpack.c.l.b16 %v349
  %v670 = vunpack.c.l.b16 %v350
  %v671 = vunpack.c.l.b16 %v351
  %v672 = vunpack.c.l.b16 %v352
  %v673 = vunpack.c.l.b16 %v353
  %v674 = vunpack.c.l.b16 %v354
  %v675 = vunpack.c.l.b16 %v355
  %v676 = vunpack.c.l.b16 %v356
  %v677 = vunpack.c.l.b16 %v357
  %v678 = vunpack.c.l.b16 %v358
  %v679 = vunpack.c.l.b16 %v359
  %v680 = vunpack.c.l.b16 %v360
  %v681 = vunpack.c.l.b16 %v361
  %v682 = vunpack.c.l.b16 %v362
  %v683 = vunpack.c.l.b16 %v363
  %v684 = vunpack.c.l.b16 %v364
  %v685 = vunpack.c.l.b16 %v365
  %v686 = vunpack.c.l.b16 %v366
  %v687 = vunpack.c.l.b16 %v367
  %v688 = vunpack.c.l.b16 %v368
  %v689 = vunpack.c.l.b16 %v369
  %v690 = vunpack.c.l.b16 %v370
  %v691 = vunpack.c.l.b16 %v371
  %v692 = vunpack.c.l.b16 %v372
  %v693 = vunpack.c.l.b16 %v373
  %v694 = vunpack.c.l.b16 %v374
  %v695 = vunpack.c.l.b16 %v375
  %v696 = vunpack.c.l.b16 %v376
  %v697 = vunpack.c.l.b16 %v377
  %v698 = vunpack.c.l.b16 %v378
  %v699 = vunpack.c.l.b16 %v379
  %v700 = vunpack.c.l.b16 %v380
  %v701 = vunpack.c.l.b16 %v381
  %v702 = vunpack.c.l.b16 %v382
  %v703 = vunpack.c.l.b16 %v383
  %v704 = vunpack.c.l.b16 %v384
  %v705 = vunpack.c.l.b16 %v385
  %v706 = vunpack.c.l.b16 %v386
  %v707 = vunpack.c.l.b16 %v387
  %v708 = vunpack.c.l.b16 %v388
  %v709 = vunpack.c.l.b16 %v389
  %v710 = vunpack.c.l.b16 %v390
  %v711 = vunpack.c.l.b16 %v391
  %v712 = vunpack.c.l.b16 %v392
  %v713 = vunpack.c.l.b16 %v393
  %v714 = vunpack.c.l.b16 %v394
  %v715 = vunpack.c.l.b16 %v395
  %v716 = vunpack.c.l.b16 %v396
  %v717 = vunpack.c.l.b16 %v397
  %v718 = vunpack.c.l.b16 %v398
  %v719 = vunpack.c.l.b16 %v399
  %v720 = vunpack.c.l.b16 %v400
  %v721 = vunpack.c.l.b16 %v401
  %v722 = vunpack.c.l.b16 %v402
  %v723 = vunpack.c.l.b16 %v403
  %v724 = vunpack.c.l.b16 %v404
  %v725 = vunpack.c.l.b16 %v405
  %v726 = vunpack.c.l.b16 %v406
  %v727 = vunpack.c.l.b16 %v407
  %v728 = vunpack.c.l.b16 %v408
  %v729 = vunpack.c.l.b16 %v409
  %v730 = vunpack.c.l.b16 %v410
  %v731 = vunpack.c.l.b16 %v411
  %v732 = vunpack.c.l.b16 %v412
  %v733 = vunpack.c.l.b16 %v413
  %v734 = vunpack.c.l.b16 %v414
  %v735 = vunpack.c.l.b16 %v415
  %v736 = vunpack.c.l.b16 %v416
  %v737 = vunpack.c.l.b16 %v417
  %v738 = vunpack.c.l.b16 %v418
  %v739 = vunpack.c.l.b16 %v419
  %v740 = vunpack.c.l.b16 %v420
  %v741 = vunpack.c.l.b16 %v421
  %v742 = vunpack.c.l.b16 %v422
  %v743 = vunpack.c.l.b16 %v423
  %v744 = vunpack.c.l.b16 %v424
  %v745 = vunpack.c.l.b16 %v425
  %v746 = vunpack.c.l.b16 %v426
  %v747 = vunpack.c.l.b16 %v427
  %v748 = vunpack.c.l.b16 %v428
  %v749 = vunpack.c.l.b16 %v429
  %v750 = vunpack.c.l.b16 %v430
  %v751 = vunpack.c.l.b16 %v431
  %v752 = vunpack.c.l.b16 %v432
  %v753 = vpack.c.b16 %v594, %v593
  %v754 = vpack.c.b16 %v596, %v595
  %v755 = vpack.c.b16 %v598, %v597
  %v756 = vpack.c.b16 %v600, %v599
  %v757 = vpack.c.b16 %v602, %v601
  %v758 = vpack.c.b16 %v604, %v603
  %v759 = vpack.c.b16 %v606, %v605
  %v760 = vpack.c.b16 %v608, %v607
  %v761 = vpack.c.b16 %v610, %v609
  %v762 = vpack.c.b16 %v612, %v611
  %v763 = vpack.c.b16 %v614, %v613
  %v764 = vpack.c.b16 %v616, %v615
  %v765 = vpack.c.b16 %v618, %v617
  %v766 = vpack.c.b16 %v620, %v619
  %v767 = vpack.c.b16 %v622, %v621
  %v768 = vpack.c.b16 %v624, %v623
  %v769 = vpack.c.b16 %v626, %v625
  %v770 = vpack.c.b16 %v628, %v627
  %v771 = vpack.c.b16 %v630, %v629
  %v772 = vpack.c.b16 %v632, %v631
  %v773 = vpack.c.b16 %v634, %v633
  %v774 = vpack.c.b16 %v636, %v635
  %v775 = vpack.c.b16 %v638, %v637
  %v776 = vpack.c.b16 %v640, %v639
  %v777 = vpack.c.b16 %v642, %v641
  %v778 = vpack.c.b16 %v644, %v643
  %v779 = vpack.c.b16 %v646, %v645
  %v780 = vpack.c.b16 %v648, %v647
  %v781 = vpack.c.b16 %v650, %v649
  %v782 = vpack.c.b16 %v652, %v651
  %v783 = vpack.c.b16 %v654, %v653
  %v784 = vpack.c.b16 %v656, %v655
  %v785 = vpack.c.b16 %v658, %v657
  %v786 = vpack.c.b16 %v660, %v659
  %v787 = vpack.c.b16 %v662, %v661
  %v788 = vpack.c.b16 %v664, %v663
  %v789 = vpack.c.b16 %v666, %v665
  %v790 = vpack.c.b16 %v668, %v667
  %v791 = vpack.c.b16 %v670, %v669
  %v792 = vpack.c.b16 %v672, %v671
  %v793 = vpack.c.b16 %v674, %v673
  %v794 = vpack.c.b16 %v676, %v675
  %v795 = vpack.c.b16 %v678, %v677
  %v796 = vpack.c.b16 %v680, %v679
  %v797 = vpack.c.b16 %v682, %v681
  %v798 = vpack.c.b16 %v684, %v683
  %v799 = vpack.c.b16 %v686, %v685
  %v800 = vpack.c.b16 %v688, %v687
  %v801 = vpack.c.b16 %v690, %v689
  %v802 = vpack.c.b16 %v692, %v691
  %v803 = vpack.c.b16 %v694, %v693
  %v804 = vpack.c.b16 %v696, %v695
  %v805 = vpack.c.b16 %v698, %v697
  %v806 = vpack.c.b16 %v700, %v699
  %v807 = vpack.c.b16 %v702, %v701
  %v808 = vpack.c.b16 %v704, %v703
  %v809 = vpack.c.b16 %v706, %v705
  %v810 = vpack.c.b16 %v708, %v707
  %v811 = vpack.c.b16 %v710, %v709
  %v812 = vpack.c.b16 %v712, %v711
  %v813 = vpack.c.b16 %v714, %v713
  %v814 = vpack.c.b16 %v716, %v715
  %v815 = vpack.c.b16 %v718, %v717
  %v816 = vpack.c.b16 %v720, %v719
  %v817 = vpack.c.b16 %v722, %v721
  %v818 = vpack.c.b16 %v724, %v723
  %v819 = vpack.c.b16 %v726, %v725
  %v820 = vpack.c.b16 %v728, %v727
  %v821 = vpack.c.b16 %v730, %v729
  %v822 = vpack.c.b16 %v732, %v731
  %v823 = vpack.c.b16 %v734, %v733
  %v824 = vpack.c.b16 %v736, %v735
  %v825 = vpack.c.b16 %v738, %v737
  %v826 = vpack.c.b16 %v740, %v739
  %v827 = vpack.c.b16 %v742, %v741
  %v828 = vpack.c.b16 %v744, %v743
  %v829 = vpack.c.b16 %v746, %v745
  %v830 = vpack.c.b16 %v748, %v747
  %v831 = vpack.c.b16 %v750, %v749
  %v832 = vpack.c.b16 %v752, %v751
  %913 = vmatprep.subr.bf16.mxu0 0
  %914 = vmatpush1.bf16.msra.mxu0 %v753
  %915 = vmatprep.subr.bf16.mxu0 0
  %916 = vmatpush1.bf16.msra.mxu0 %v754
  %917 = vmatprep.subr.bf16.mxu0 0
  %918 = vmatpush1.bf16.msra.mxu0 %v755
  %919 = vmatprep.subr.bf16.mxu0 0
  %920 = vmatpush1.bf16.msra.mxu0 %v756
  %921 = vmatprep.subr.bf16.mxu0 0
  %922 = vmatpush1.bf16.msra.mxu0 %v757
  %923 = vmatprep.subr.bf16.mxu0 0
  %924 = vmatpush1.bf16.msra.mxu0 %v758
  %925 = vmatprep.subr.bf16.mxu0 0
  %926 = vmatpush1.bf16.msra.mxu0 %v759
  %927 = vmatprep.subr.bf16.mxu0 0
  %928 = vmatpush1.bf16.msra.mxu0 %v760
  %929 = vmatprep.subr.bf16.mxu0 0
  %930 = vmatpush1.bf16.msra.mxu0 %v761
  %931 = vmatprep.subr.bf16.mxu0 0
  %932 = vmatpush1.bf16.msra.mxu0 %v762
  %933 = vmatprep.subr.bf16.mxu0 0
  %934 = vmatpush1.bf16.msra.mxu0 %v763
  %935 = vmatprep.subr.bf16.mxu0 0
  %936 = vmatpush1.bf16.msra.mxu0 %v764
  %937 = vmatprep.subr.bf16.mxu0 0
  %938 = vmatpush1.bf16.msra.mxu0 %v765
  %939 = vmatprep.subr.bf16.mxu0 0
  %940 = vmatpush1.bf16.msra.mxu0 %v766
  %941 = vmatprep.subr.bf16.mxu0 0
  %942 = vmatpush1.bf16.msra.mxu0 %v767
  %943 = vmatprep.subr.bf16.mxu0 0
  %944 = vmatpush1.bf16.msra.mxu0 %v768
  %945 = vmatprep.mubr.bf16.mxu0 %v194
  %946 = vmatmul.mubr.bf16.gmra.mrb[0].mxu0 %v193
  %v947 = vpop.f32.mrb[0].mxu0
  %v948 = vadd.f32 0.0, %v947
  %v949 = vpop.f32.mrb[0].mxu0
  %v950 = vpop.f32.mrb[0].mxu0
  %v951 = vadd.f32 0.0, %v950
  %v952 = vpop.f32.mrb[0].mxu0
  %953 = vmatprep.mubr.bf16.mxu0 %v204
  %954 = vmatmul.mubr.bf16.gmra.mrb[0].mxu0 %v203
  %v955 = vpop.f32.mrb[0].mxu0
  %v956 = vadd.f32 0.0, %v955
  %v957 = vpop.f32.mrb[0].mxu0
  %v958 = vpop.f32.mrb[0].mxu0
  %v959 = vadd.f32 0.0, %v958
  %v960 = vpop.f32.mrb[0].mxu0
  %961 = vmatprep.mubr.bf16.mxu0 %v214
  %962 = vmatmul.mubr.bf16.gmra.mrb[0].mxu0 %v213
  %v963 = vpop.f32.mrb[0].mxu0
  %v964 = vadd.f32 0.0, %v963
  %v965 = vpop.f32.mrb[0].mxu0
  %v966 = vpop.f32.mrb[0].mxu0
  %v967 = vadd.f32 0.0, %v966
  %v968 = vpop.f32.mrb[0].mxu0
  %969 = vmatprep.mubr.bf16.mxu0 %v224
  %970 = vmatmul.mubr.bf16.gmra.mrb[0].mxu0 %v223
  %v971 = vpop.f32.mrb[0].mxu0
  %v972 = vadd.f32 0.0, %v971
  %v973 = vpop.f32.mrb[0].mxu0
  %v974 = vpop.f32.mrb[0].mxu0
  %v975 = vadd.f32 0.0, %v974
  %v976 = vpop.f32.mrb[0].mxu0
  %977 = vmatprep.mubr.bf16.mxu0 %v234
  %978 = vmatmul.mubr.bf16.gmra.mrb[0].mxu0 %v233
  %v979 = vpop.f32.mrb[0].mxu0
  %v980 = vadd.f32 0.0, %v979
  %v981 = vpop.f32.mrb[0].mxu0
  %v982 = vpop.f32.mrb[0].mxu0
  %v983 = vadd.f32 0.0, %v982
  %v984 = vpop.f32.mrb[0].mxu0
  %985 = vmatprep.mubr.bf16.mxu0 %v244
  %986 = vmatmul.mubr.bf16.gmra.mrb[0].mxu0 %v243
  %v987 = vpop.f32.mrb[0].mxu0
  %v988 = vadd.f32 0.0, %v987
  %v989 = vpop.f32.mrb[0].mxu0
  %v990 = vpop.f32.mrb[0].mxu0
  %v991 = vadd.f32 0.0, %v990
  %v992 = vpop.f32.mrb[0].mxu0
  %993 = vmatprep.mubr.bf16.mxu0 %v254
  %994 = vmatmul.mubr.bf16.gmra.mrb[0].mxu0 %v253
  %v995 = vpop.f32.mrb[0].mxu0
  %v996 = vadd.f32 0.0, %v995
  %v997 = vpop.f32.mrb[0].mxu0
  %v998 = vpop.f32.mrb[0].mxu0
  %v999 = vadd.f32 0.0, %v998
  %v1000 = vpop.f32.mrb[0].mxu0
  %1001 = vmatprep.mubr.bf16.mxu0 %v264
  %1002 = vmatmul.mubr.bf16.gmra.mrb[0].mxu0 %v263
  %v1003 = vpop.f32.mrb[0].mxu0
  %v1004 = vadd.f32 0.0, %v1003
  %v1005 = vpop.f32.mrb[0].mxu0
  %v1006 = vpop.f32.mrb[0].mxu0
  %v1007 = vadd.f32 0.0, %v1006
  %v1008 = vpop.f32.mrb[0].mxu0
  %1009 = vdwg.mxu0
  %1010 = vmatprep.subr.bf16.mxu0 0
  %1011 = vmatpush1.bf16.msra.mxu0 %v769
  %1012 = vmatprep.subr.bf16.mxu0 0
  %1013 = vmatpush1.bf16.msra.mxu0 %v770
  %1014 = vmatprep.subr.bf16.mxu0 0
  %1015 = vmatpush1.bf16.msra.mxu0 %v771
  %1016 = vmatprep.subr.bf16.mxu0 0
  %1017 = vmatpush1.bf16.msra.mxu0 %v772
  %1018 = vmatprep.subr.bf16.mxu0 0
  %1019 = vmatpush1.bf16.msra.mxu0 %v773
  %1020 = vmatprep.subr.bf16.mxu0 0
  %1021 = vmatpush1.bf16.msra.mxu0 %v774
  %1022 = vmatprep.subr.bf16.mxu0 0
  %1023 = vmatpush1.bf16.msra.mxu0 %v775
  %1024 = vmatprep.subr.bf16.mxu0 0
  %1025 = vmatpush1.bf16.msra.mxu0 %v776
  %1026 = vmatprep.subr.bf16.mxu0 0
  %1027 = vmatpush1.bf16.msra.mxu0 %v777
  %1028 = vmatprep.subr.bf16.mxu0 0
  %1029 = vmatpush1.bf16.msra.mxu0 %v778
  %1030 = vmatprep.subr.bf16.mxu0 0
  %1031 = vmatpush1.bf16.msra.mxu0 %v779
  %1032 = vmatprep.subr.bf16.mxu0 0
  %1033 = vmatpush1.bf16.msra.mxu0 %v780
  %1034 = vmatprep.subr.bf16.mxu0 0
  %1035 = vmatpush1.bf16.msra.mxu0 %v781
  %1036 = vmatprep.subr.bf16.mxu0 0
  %1037 = vmatpush1.bf16.msra.mxu0 %v782
  %1038 = vmatprep.subr.bf16.mxu0 0
  %1039 = vmatpush1.bf16.msra.mxu0 %v783
  %1040 = vmatprep.subr.bf16.mxu0 0
  %1041 = vmatpush1.bf16.msra.mxu0 %v784
  %1042 = vmatprep.mubr.bf16.mxu0 %v196
  %1043 = vmatmul.mubr.bf16.gmra.mrb[0].mxu0 %v195
  %v1044 = vpop.f32.mrb[0].mxu0
  %v1045 = vadd.f32 %v948, %v1044
  %v1046 = vpop.f32.mrb[0].mxu0
  %v1047 = vpop.f32.mrb[0].mxu0
  %v1048 = vadd.f32 %v951, %v1047
  %v1049 = vpop.f32.mrb[0].mxu0
  %1050 = vmatprep.mubr.bf16.mxu0 %v206
  %1051 = vmatmul.mubr.bf16.gmra.mrb[0].mxu0 %v205
  %v1052 = vpop.f32.mrb[0].mxu0
  %v1053 = vadd.f32 %v956, %v1052
  %v1054 = vpop.f32.mrb[0].mxu0
  %v1055 = vpop.f32.mrb[0].mxu0
  %v1056 = vadd.f32 %v959, %v1055
  %v1057 = vpop.f32.mrb[0].mxu0
  %1058 = vmatprep.mubr.bf16.mxu0 %v216
  %1059 = vmatmul.mubr.bf16.gmra.mrb[0].mxu0 %v215
  %v1060 = vpop.f32.mrb[0].mxu0
  %v1061 = vadd.f32 %v964, %v1060
  %v1062 = vpop.f32.mrb[0].mxu0
  %v1063 = vpop.f32.mrb[0].mxu0
  %v1064 = vadd.f32 %v967, %v1063
  %v1065 = vpop.f32.mrb[0].mxu0
  %1066 = vmatprep.mubr.bf16.mxu0 %v226
  %1067 = vmatmul.mubr.bf16.gmra.mrb[0].mxu0 %v225
  %v1068 = vpop.f32.mrb[0].mxu0
  %v1069 = vadd.f32 %v972, %v1068
  %v1070 = vpop.f32.mrb[0].mxu0
  %v1071 = vpop.f32.mrb[0].mxu0
  %v1072 = vadd.f32 %v975, %v1071
  %v1073 = vpop.f32.mrb[0].mxu0
  %1074 = vmatprep.mubr.bf16.mxu0 %v236
  %1075 = vmatmul.mubr.bf16.gmra.mrb[0].mxu0 %v235
  %v1076 = vpop.f32.mrb[0].mxu0
  %v1077 = vadd.f32 %v980, %v1076
  %v1078 = vpop.f32.mrb[0].mxu0
  %v1079 = vpop.f32.mrb[0].mxu0
  %v1080 = vadd.f32 %v983, %v1079
  %v1081 = vpop.f32.mrb[0].mxu0
  %1082 = vmatprep.mubr.bf16.mxu0 %v246
  %1083 = vmatmul.mubr.bf16.gmra.mrb[0].mxu0 %v245
  %v1084 = vpop.f32.mrb[0].mxu0
  %v1085 = vadd.f32 %v988, %v1084
  %v1086 = vpop.f32.mrb[0].mxu0
  %v1087 = vpop.f32.mrb[0].mxu0
  %v1088 = vadd.f32 %v991, %v1087
  %v1089 = vpop.f32.mrb[0].mxu0
  %1090 = vmatprep.mubr.bf16.mxu0 %v256
  %1091 = vmatmul.mubr.bf16.gmra.mrb[0].mxu0 %v255
  %v1092 = vpop.f32.mrb[0].mxu0
  %v1093 = vadd.f32 %v996, %v1092
  %v1094 = vpop.f32.mrb[0].mxu0
  %v1095 = vpop.f32.mrb[0].mxu0
  %v1096 = vadd.f32 %v999, %v1095
  %v1097 = vpop.f32.mrb[0].mxu0
  %1098 = vmatprep.mubr.bf16.mxu0 %v266
  %1099 = vmatmul.mubr.bf16.gmra.mrb[0].mxu0 %v265
  %v1100 = vpop.f32.mrb[0].mxu0
  %v1101 = vadd.f32 %v1004, %v1100
  %v1102 = vpop.f32.mrb[0].mxu0
  %v1103 = vpop.f32.mrb[0].mxu0
  %v1104 = vadd.f32 %v1007, %v1103
  %v1105 = vpop.f32.mrb[0].mxu0
  %1106 = vdwg.mxu0
  %1107 = vmatprep.subr.bf16.mxu0 0
  %1108 = vmatpush1.bf16.msra.mxu0 %v785
  %1109 = vmatprep.subr.bf16.mxu0 0
  %1110 = vmatpush1.bf16.msra.mxu0 %v786
  %1111 = vmatprep.subr.bf16.mxu0 0
  %1112 = vmatpush1.bf16.msra.mxu0 %v787
  %1113 = vmatprep.subr.bf16.mxu0 0
  %1114 = vmatpush1.bf16.msra.mxu0 %v788
  %1115 = vmatprep.subr.bf16.mxu0 0
  %1116 = vmatpush1.bf16.msra.mxu0 %v789
  %1117 = vmatprep.subr.bf16.mxu0 0
  %1118 = vmatpush1.bf16.msra.mxu0 %v790
  %1119 = vmatprep.subr.bf16.mxu0 0
  %1120 = vmatpush1.bf16.msra.mxu0 %v791
  %1121 = vmatprep.subr.bf16.mxu0 0
  %1122 = vmatpush1.bf16.msra.mxu0 %v792
  %1123 = vmatprep.subr.bf16.mxu0 0
  %1124 = vmatpush1.bf16.msra.mxu0 %v793
  %1125 = vmatprep.subr.bf16.mxu0 0
  %1126 = vmatpush1.bf16.msra.mxu0 %v794
  %1127 = vmatprep.subr.bf16.mxu0 0
  %1128 = vmatpush1.bf16.msra.mxu0 %v795
  %1129 = vmatprep.subr.bf16.mxu0 0
  %1130 = vmatpush1.bf16.msra.mxu0 %v796
  %1131 = vmatprep.subr.bf16.mxu0 0
  %1132 = vmatpush1.bf16.msra.mxu0 %v797
  %1133 = vmatprep.subr.bf16.mxu0 0
  %1134 = vmatpush1.bf16.msra.mxu0 %v798
  %1135 = vmatprep.subr.bf16.mxu0 0
  %1136 = vmatpush1.bf16.msra.mxu0 %v799
  %1137 = vmatprep.subr.bf16.mxu0 0
  %1138 = vmatpush1.bf16.msra.mxu0 %v800
  %1139 = vmatprep.mubr.bf16.mxu0 %v198
  %1140 = vmatmul.mubr.bf16.gmra.mrb[0].mxu0 %v197
  %v1141 = vpop.f32.mrb[0].mxu0
  %v1142 = vadd.f32 %v1045, %v1141
  %v1143 = vpop.f32.mrb[0].mxu0
  %v1144 = vpop.f32.mrb[0].mxu0
  %v1145 = vadd.f32 %v1048, %v1144
  %v1146 = vpop.f32.mrb[0].mxu0
  %1147 = vmatprep.mubr.bf16.mxu0 %v208
  %1148 = vmatmul.mubr.bf16.gmra.mrb[0].mxu0 %v207
  %v1149 = vpop.f32.mrb[0].mxu0
  %v1150 = vadd.f32 %v1053, %v1149
  %v1151 = vpop.f32.mrb[0].mxu0
  %v1152 = vpop.f32.mrb[0].mxu0
  %v1153 = vadd.f32 %v1056, %v1152
  %v1154 = vpop.f32.mrb[0].mxu0
  %1155 = vmatprep.mubr.bf16.mxu0 %v218
  %1156 = vmatmul.mubr.bf16.gmra.mrb[0].mxu0 %v217
  %v1157 = vpop.f32.mrb[0].mxu0
  %v1158 = vadd.f32 %v1061, %v1157
  %v1159 = vpop.f32.mrb[0].mxu0
  %v1160 = vpop.f32.mrb[0].mxu0
  %v1161 = vadd.f32 %v1064, %v1160
  %v1162 = vpop.f32.mrb[0].mxu0
  %1163 = vmatprep.mubr.bf16.mxu0 %v228
  %1164 = vmatmul.mubr.bf16.gmra.mrb[0].mxu0 %v227
  %v1165 = vpop.f32.mrb[0].mxu0
  %v1166 = vadd.f32 %v1069, %v1165
  %v1167 = vpop.f32.mrb[0].mxu0
  %v1168 = vpop.f32.mrb[0].mxu0
  %v1169 = vadd.f32 %v1072, %v1168
  %v1170 = vpop.f32.mrb[0].mxu0
  %1171 = vmatprep.mubr.bf16.mxu0 %v238
  %1172 = vmatmul.mubr.bf16.gmra.mrb[0].mxu0 %v237
  %v1173 = vpop.f32.mrb[0].mxu0
  %v1174 = vadd.f32 %v1077, %v1173
  %v1175 = vpop.f32.mrb[0].mxu0
  %v1176 = vpop.f32.mrb[0].mxu0
  %v1177 = vadd.f32 %v1080, %v1176
  %v1178 = vpop.f32.mrb[0].mxu0
  %1179 = vmatprep.mubr.bf16.mxu0 %v248
  %1180 = vmatmul.mubr.bf16.gmra.mrb[0].mxu0 %v247
  %v1181 = vpop.f32.mrb[0].mxu0
  %v1182 = vadd.f32 %v1085, %v1181
  %v1183 = vpop.f32.mrb[0].mxu0
  %v1184 = vpop.f32.mrb[0].mxu0
  %v1185 = vadd.f32 %v1088, %v1184
  %v1186 = vpop.f32.mrb[0].mxu0
  %1187 = vmatprep.mubr.bf16.mxu0 %v258
  %1188 = vmatmul.mubr.bf16.gmra.mrb[0].mxu0 %v257
  %v1189 = vpop.f32.mrb[0].mxu0
  %v1190 = vadd.f32 %v1093, %v1189
  %v1191 = vpop.f32.mrb[0].mxu0
  %v1192 = vpop.f32.mrb[0].mxu0
  %v1193 = vadd.f32 %v1096, %v1192
  %v1194 = vpop.f32.mrb[0].mxu0
  %1195 = vmatprep.mubr.bf16.mxu0 %v268
  %1196 = vmatmul.mubr.bf16.gmra.mrb[0].mxu0 %v267
  %v1197 = vpop.f32.mrb[0].mxu0
  %v1198 = vadd.f32 %v1101, %v1197
  %v1199 = vpop.f32.mrb[0].mxu0
  %v1200 = vpop.f32.mrb[0].mxu0
  %v1201 = vadd.f32 %v1104, %v1200
  %v1202 = vpop.f32.mrb[0].mxu0
  %1203 = vdwg.mxu0
  %1204 = vmatprep.subr.bf16.mxu0 0
  %1205 = vmatpush1.bf16.msra.mxu0 %v801
  %1206 = vmatprep.subr.bf16.mxu0 0
  %1207 = vmatpush1.bf16.msra.mxu0 %v802
  %1208 = vmatprep.subr.bf16.mxu0 0
  %1209 = vmatpush1.bf16.msra.mxu0 %v803
  %1210 = vmatprep.subr.bf16.mxu0 0
  %1211 = vmatpush1.bf16.msra.mxu0 %v804
  %1212 = vmatprep.subr.bf16.mxu0 0
  %1213 = vmatpush1.bf16.msra.mxu0 %v805
  %1214 = vmatprep.subr.bf16.mxu0 0
  %1215 = vmatpush1.bf16.msra.mxu0 %v806
  %1216 = vmatprep.subr.bf16.mxu0 0
  %1217 = vmatpush1.bf16.msra.mxu0 %v807
  %1218 = vmatprep.subr.bf16.mxu0 0
  %1219 = vmatpush1.bf16.msra.mxu0 %v808
  %1220 = vmatprep.subr.bf16.mxu0 0
  %1221 = vmatpush1.bf16.msra.mxu0 %v809
  %1222 = vmatprep.subr.bf16.mxu0 0
  %1223 = vmatpush1.bf16.msra.mxu0 %v810
  %1224 = vmatprep.subr.bf16.mxu0 0
  %1225 = vmatpush1.bf16.msra.mxu0 %v811
  %1226 = vmatprep.subr.bf16.mxu0 0
  %1227 = vmatpush1.bf16.msra.mxu0 %v812
  %1228 = vmatprep.subr.bf16.mxu0 0
  %1229 = vmatpush1.bf16.msra.mxu0 %v813
  %1230 = vmatprep.subr.bf16.mxu0 0
  %1231 = vmatpush1.bf16.msra.mxu0 %v814
  %1232 = vmatprep.subr.bf16.mxu0 0
  %1233 = vmatpush1.bf16.msra.mxu0 %v815
  %1234 = vmatprep.subr.bf16.mxu0 0
  %1235 = vmatpush1.bf16.msra.mxu0 %v816
  %1236 = vmatprep.mubr.bf16.mxu0 %v200
  %1237 = vmatmul.mubr.bf16.gmra.mrb[0].mxu0 %v199
  %v1238 = vpop.f32.mrb[0].mxu0
  %v1239 = vadd.f32 %v1142, %v1238
  %v1240 = vpop.f32.mrb[0].mxu0
  %v1241 = vpop.f32.mrb[0].mxu0
  %v1242 = vadd.f32 %v1145, %v1241
  %v1243 = vpop.f32.mrb[0].mxu0
  %1244 = vmatprep.mubr.bf16.mxu0 %v210
  %1245 = vmatmul.mubr.bf16.gmra.mrb[0].mxu0 %v209
  %v1246 = vpop.f32.mrb[0].mxu0
  %v1247 = vadd.f32 %v1150, %v1246
  %v1248 = vpop.f32.mrb[0].mxu0
  %v1249 = vpop.f32.mrb[0].mxu0
  %v1250 = vadd.f32 %v1153, %v1249
  %v1251 = vpop.f32.mrb[0].mxu0
  %1252 = vmatprep.mubr.bf16.mxu0 %v220
  %1253 = vmatmul.mubr.bf16.gmra.mrb[0].mxu0 %v219
  %v1254 = vpop.f32.mrb[0].mxu0
  %v1255 = vadd.f32 %v1158, %v1254
  %v1256 = vpop.f32.mrb[0].mxu0
  %v1257 = vpop.f32.mrb[0].mxu0
  %v1258 = vadd.f32 %v1161, %v1257
  %v1259 = vpop.f32.mrb[0].mxu0
  %1260 = vmatprep.mubr.bf16.mxu0 %v230
  %1261 = vmatmul.mubr.bf16.gmra.mrb[0].mxu0 %v229
  %v1262 = vpop.f32.mrb[0].mxu0
  %v1263 = vadd.f32 %v1166, %v1262
  %v1264 = vpop.f32.mrb[0].mxu0
  %v1265 = vpop.f32.mrb[0].mxu0
  %v1266 = vadd.f32 %v1169, %v1265
  %v1267 = vpop.f32.mrb[0].mxu0
  %1268 = vmatprep.mubr.bf16.mxu0 %v240
  %1269 = vmatmul.mubr.bf16.gmra.mrb[0].mxu0 %v239
  %v1270 = vpop.f32.mrb[0].mxu0
  %v1271 = vadd.f32 %v1174, %v1270
  %v1272 = vpop.f32.mrb[0].mxu0
  %v1273 = vpop.f32.mrb[0].mxu0
  %v1274 = vadd.f32 %v1177, %v1273
  %v1275 = vpop.f32.mrb[0].mxu0
  %1276 = vmatprep.mubr.bf16.mxu0 %v250
  %1277 = vmatmul.mubr.bf16.gmra.mrb[0].mxu0 %v249
  %v1278 = vpop.f32.mrb[0].mxu0
  %v1279 = vadd.f32 %v1182, %v1278
  %v1280 = vpop.f32.mrb[0].mxu0
  %v1281 = vpop.f32.mrb[0].mxu0
  %v1282 = vadd.f32 %v1185, %v1281
  %v1283 = vpop.f32.mrb[0].mxu0
  %1284 = vmatprep.mubr.bf16.mxu0 %v260
  %1285 = vmatmul.mubr.bf16.gmra.mrb[0].mxu0 %v259
  %v1286 = vpop.f32.mrb[0].mxu0
  %v1287 = vadd.f32 %v1190, %v1286
  %v1288 = vpop.f32.mrb[0].mxu0
  %v1289 = vpop.f32.mrb[0].mxu0
  %v1290 = vadd.f32 %v1193, %v1289
  %v1291 = vpop.f32.mrb[0].mxu0
  %1292 = vmatprep.mubr.bf16.mxu0 %v270
  %1293 = vmatmul.mubr.bf16.gmra.mrb[0].mxu0 %v269
  %v1294 = vpop.f32.mrb[0].mxu0
  %v1295 = vadd.f32 %v1198, %v1294
  %v1296 = vpop.f32.mrb[0].mxu0
  %v1297 = vpop.f32.mrb[0].mxu0
  %v1298 = vadd.f32 %v1201, %v1297
  %v1299 = vpop.f32.mrb[0].mxu0
  %1300 = vdwg.mxu0
  %1301 = vmatprep.subr.bf16.mxu0 0
  %1302 = vmatpush1.bf16.msra.mxu0 %v817
  %1303 = vmatprep.subr.bf16.mxu0 0
  %1304 = vmatpush1.bf16.msra.mxu0 %v818
  %1305 = vmatprep.subr.bf16.mxu0 0
  %1306 = vmatpush1.bf16.msra.mxu0 %v819
  %1307 = vmatprep.subr.bf16.mxu0 0
  %1308 = vmatpush1.bf16.msra.mxu0 %v820
  %1309 = vmatprep.subr.bf16.mxu0 0
  %1310 = vmatpush1.bf16.msra.mxu0 %v821
  %1311 = vmatprep.subr.bf16.mxu0 0
  %1312 = vmatpush1.bf16.msra.mxu0 %v822
  %1313 = vmatprep.subr.bf16.mxu0 0
  %1314 = vmatpush1.bf16.msra.mxu0 %v823
  %1315 = vmatprep.subr.bf16.mxu0 0
  %1316 = vmatpush1.bf16.msra.mxu0 %v824
  %1317 = vmatprep.subr.bf16.mxu0 0
  %1318 = vmatpush1.bf16.msra.mxu0 %v825
  %1319 = vmatprep.subr.bf16.mxu0 0
  %1320 = vmatpush1.bf16.msra.mxu0 %v826
  %1321 = vmatprep.subr.bf16.mxu0 0
  %1322 = vmatpush1.bf16.msra.mxu0 %v827
  %1323 = vmatprep.subr.bf16.mxu0 0
  %1324 = vmatpush1.bf16.msra.mxu0 %v828
  %1325 = vmatprep.subr.bf16.mxu0 0
  %1326 = vmatpush1.bf16.msra.mxu0 %v829
  %1327 = vmatprep.subr.bf16.mxu0 0
  %1328 = vmatpush1.bf16.msra.mxu0 %v830
  %1329 = vmatprep.subr.bf16.mxu0 0
  %1330 = vmatpush1.bf16.msra.mxu0 %v831
  %1331 = vmatprep.subr.bf16.mxu0 0
  %1332 = vmatpush1.bf16.msra.mxu0 %v832
  %1333 = vmatprep.mubr.bf16.mxu0 %v202
  %1334 = vmatmul.mubr.bf16.gmra.mrb[0].mxu0 %v201
  %v1335 = vpop.f32.mrb[0].mxu0
  %v1336 = vadd.f32 %v1239, %v1335
  %v1337 = vpop.f32.mrb[0].mxu0
  %v1338 = vpop.f32.mrb[0].mxu0
  %v1339 = vadd.f32 %v1242, %v1338
  %v1340 = vpop.f32.mrb[0].mxu0
  %1341 = vmatprep.mubr.bf16.mxu0 %v212
  %1342 = vmatmul.mubr.bf16.gmra.mrb[0].mxu0 %v211
  %v1343 = vpop.f32.mrb[0].mxu0
  %v1344 = vadd.f32 %v1247, %v1343
  %v1345 = vpop.f32.mrb[0].mxu0
  %v1346 = vpop.f32.mrb[0].mxu0
  %v1347 = vadd.f32 %v1250, %v1346
  %v1348 = vpop.f32.mrb[0].mxu0
  %1349 = vmatprep.mubr.bf16.mxu0 %v222
  %1350 = vmatmul.mubr.bf16.gmra.mrb[0].mxu0 %v221
  %v1351 = vpop.f32.mrb[0].mxu0
  %v1352 = vadd.f32 %v1255, %v1351
  %v1353 = vpop.f32.mrb[0].mxu0
  %v1354 = vpop.f32.mrb[0].mxu0
  %v1355 = vadd.f32 %v1258, %v1354
  %v1356 = vpop.f32.mrb[0].mxu0
  %1357 = vmatprep.mubr.bf16.mxu0 %v232
  %1358 = vmatmul.mubr.bf16.gmra.mrb[0].mxu0 %v231
  %v1359 = vpop.f32.mrb[0].mxu0
  %v1360 = vadd.f32 %v1263, %v1359
  %v1361 = vpop.f32.mrb[0].mxu0
  %v1362 = vpop.f32.mrb[0].mxu0
  %v1363 = vadd.f32 %v1266, %v1362
  %v1364 = vpop.f32.mrb[0].mxu0
  %1365 = vmatprep.mubr.bf16.mxu0 %v242
  %1366 = vmatmul.mubr.bf16.gmra.mrb[0].mxu0 %v241
  %v1367 = vpop.f32.mrb[0].mxu0
  %v1368 = vadd.f32 %v1271, %v1367
  %v1369 = vpop.f32.mrb[0].mxu0
  %v1370 = vpop.f32.mrb[0].mxu0
  %v1371 = vadd.f32 %v1274, %v1370
  %v1372 = vpop.f32.mrb[0].mxu0
  %1373 = vmatprep.mubr.bf16.mxu0 %v252
  %1374 = vmatmul.mubr.bf16.gmra.mrb[0].mxu0 %v251
  %v1375 = vpop.f32.mrb[0].mxu0
  %v1376 = vadd.f32 %v1279, %v1375
  %v1377 = vpop.f32.mrb[0].mxu0
  %v1378 = vpop.f32.mrb[0].mxu0
  %v1379 = vadd.f32 %v1282, %v1378
  %v1380 = vpop.f32.mrb[0].mxu0
  %1381 = vmatprep.mubr.bf16.mxu0 %v262
  %1382 = vmatmul.mubr.bf16.gmra.mrb[0].mxu0 %v261
  %v1383 = vpop.f32.mrb[0].mxu0
  %v1384 = vadd.f32 %v1287, %v1383
  %v1385 = vpop.f32.mrb[0].mxu0
  %v1386 = vpop.f32.mrb[0].mxu0
  %v1387 = vadd.f32 %v1290, %v1386
  %v1388 = vpop.f32.mrb[0].mxu0
  %1389 = vmatprep.mubr.bf16.mxu0 %v272
  %1390 = vmatmul.mubr.bf16.gmra.mrb[0].mxu0 %v271
  %v1391 = vpop.f32.mrb[0].mxu0
  %v1392 = vadd.f32 %v1295, %v1391
  %v1393 = vpop.f32.mrb[0].mxu0
  %v1394 = vpop.f32.mrb[0].mxu0
  %v1395 = vadd.f32 %v1298, %v1394
  %v1396 = vpop.f32.mrb[0].mxu0
  %1397 = vdwg.mxu0
  %vm1415 = vcmask 1046528
  %v1416 = vrot.slane %v1336, 1
  %v1417 = vrot.slane %v1339, 1
  %v1418 = vsel %vm1415, %v1416, %v1417
  %v1419 = vrot.slane %v1344, 1
  %v1420 = vsel %vm1415, %v1417, %v1419
  %v1421 = vrot.slane %v1347, 1
  %v1422 = vsel %vm1415, %v1419, %v1421
  %v1423 = vrot.slane %v1352, 1
  %v1424 = vsel %vm1415, %v1421, %v1423
  %v1425 = vrot.slane %v1355, 1
  %v1426 = vsel %vm1415, %v1423, %v1425
  %v1427 = vrot.slane %v1360, 1
  %v1428 = vsel %vm1415, %v1425, %v1427
  %v1429 = vrot.slane %v1363, 1
  %v1430 = vsel %vm1415, %v1427, %v1429
  %v1431 = vrot.slane %v1368, 1
  %v1432 = vsel %vm1415, %v1429, %v1431
  %v1433 = vrot.slane %v1371, 1
  %v1434 = vsel %vm1415, %v1431, %v1433
  %v1435 = vrot.slane %v1376, 1
  %v1436 = vsel %vm1415, %v1433, %v1435
  %v1437 = vrot.slane %v1379, 1
  %v1438 = vsel %vm1415, %v1435, %v1437
  %v1439 = vrot.slane %v1384, 1
  %v1440 = vsel %vm1415, %v1437, %v1439
  %v1441 = vrot.slane %v1387, 1
  %v1442 = vsel %vm1415, %v1439, %v1441
  %v1443 = vrot.slane %v1392, 1
  %v1444 = vsel %vm1415, %v1441, %v1443
  %v1445 = vrot.slane %v1395, 1
  %v1446 = vsel %vm1415, %v1443, %v1445
  %v1447 = vrot.slane 0.0, 1
  %v1448 = vsel %vm1415, %v1445, %v1447
  %1449 = vrot.lane.b32.xlu0 %v1418, 96
  %v1450 = vpop.permute.xlu0 %1449
  %1451 = vrot.lane.b32.xlu0 %v1420, 96
  %v1452 = vpop.permute.xlu0 %1451
  %1453 = vrot.lane.b32.xlu0 %v1422, 96
  %v1454 = vpop.permute.xlu0 %1453
  %1455 = vrot.lane.b32.xlu0 %v1424, 96
  %v1456 = vpop.permute.xlu0 %1455
  %1457 = vrot.lane.b32.xlu0 %v1426, 96
  %v1458 = vpop.permute.xlu0 %1457
  %1459 = vrot.lane.b32.xlu0 %v1428, 96
  %v1460 = vpop.permute.xlu0 %1459
  %1461 = vrot.lane.b32.xlu0 %v1430, 96
  %v1462 = vpop.permute.xlu0 %1461
  %1463 = vrot.lane.b32.xlu0 %v1432, 96
  %v1464 = vpop.permute.xlu0 %1463
  %1465 = vrot.lane.b32.xlu0 %v1434, 96
  %v1466 = vpop.permute.xlu0 %1465
  %1467 = vrot.lane.b32.xlu0 %v1436, 96
  %v1468 = vpop.permute.xlu0 %1467
  %1469 = vrot.lane.b32.xlu0 %v1438, 96
  %v1470 = vpop.permute.xlu0 %1469
  %1471 = vrot.lane.b32.xlu0 %v1440, 96
  %v1472 = vpop.permute.xlu0 %1471
  %1473 = vrot.lane.b32.xlu0 %v1442, 96
  %v1474 = vpop.permute.xlu0 %1473
  %1475 = vrot.lane.b32.xlu0 %v1444, 96
  %v1476 = vpop.permute.xlu0 %1475
  %1477 = vrot.lane.b32.xlu0 %v1446, 96
  %v1478 = vpop.permute.xlu0 %1477
  %1479 = vrot.lane.b32.xlu0 %v1448, 96
  %v1480 = vpop.permute.xlu0 %1479
  %v1497 = vadd.f32 %v1336, %v1450
  %v1498 = vadd.f32 %v1339, %v1452
  %v1499 = vadd.f32 %v1344, %v1454
  %v1500 = vadd.f32 %v1347, %v1456
  %v1501 = vadd.f32 %v1352, %v1458
  %v1502 = vadd.f32 %v1355, %v1460
  %v1503 = vadd.f32 %v1360, %v1462
  %v1504 = vadd.f32 %v1363, %v1464
  %v1505 = vadd.f32 %v1368, %v1466
  %v1506 = vadd.f32 %v1371, %v1468
  %v1507 = vadd.f32 %v1376, %v1470
  %v1508 = vadd.f32 %v1379, %v1472
  %v1509 = vadd.f32 %v1384, %v1474
  %v1510 = vadd.f32 %v1387, %v1476
  %v1511 = vadd.f32 %v1392, %v1478
  %v1512 = vadd.f32 %v1395, %v1480
  %vm1513 = vcmask 1045504
  %v1514 = vrot.slane %v1336, 2
  %v1515 = vrot.slane %v1339, 2
  %v1516 = vsel %vm1513, %v1514, %v1515
  %v1517 = vrot.slane %v1344, 2
  %v1518 = vsel %vm1513, %v1515, %v1517
  %v1519 = vrot.slane %v1347, 2
  %v1520 = vsel %vm1513, %v1517, %v1519
  %v1521 = vrot.slane %v1352, 2
  %v1522 = vsel %vm1513, %v1519, %v1521
  %v1523 = vrot.slane %v1355, 2
  %v1524 = vsel %vm1513, %v1521, %v1523
  %v1525 = vrot.slane %v1360, 2
  %v1526 = vsel %vm1513, %v1523, %v1525
  %v1527 = vrot.slane %v1363, 2
  %v1528 = vsel %vm1513, %v1525, %v1527
  %v1529 = vrot.slane %v1368, 2
  %v1530 = vsel %vm1513, %v1527, %v1529
  %v1531 = vrot.slane %v1371, 2
  %v1532 = vsel %vm1513, %v1529, %v1531
  %v1533 = vrot.slane %v1376, 2
  %v1534 = vsel %vm1513, %v1531, %v1533
  %v1535 = vrot.slane %v1379, 2
  %v1536 = vsel %vm1513, %v1533, %v1535
  %v1537 = vrot.slane %v1384, 2
  %v1538 = vsel %vm1513, %v1535, %v1537
  %v1539 = vrot.slane %v1387, 2
  %v1540 = vsel %vm1513, %v1537, %v1539
  %v1541 = vrot.slane %v1392, 2
  %v1542 = vsel %vm1513, %v1539, %v1541
  %v1543 = vrot.slane %v1395, 2
  %v1544 = vsel %vm1513, %v1541, %v1543
  %v1545 = vrot.slane 0.0, 2
  %v1546 = vsel %vm1513, %v1543, %v1545
  %1547 = vrot.lane.b32.xlu0 %v1516, 64
  %v1548 = vpop.permute.xlu0 %1547
  %1549 = vrot.lane.b32.xlu0 %v1518, 64
  %v1550 = vpop.permute.xlu0 %1549
  %1551 = vrot.lane.b32.xlu0 %v1520, 64
  %v1552 = vpop.permute.xlu0 %1551
  %1553 = vrot.lane.b32.xlu0 %v1522, 64
  %v1554 = vpop.permute.xlu0 %1553
  %1555 = vrot.lane.b32.xlu0 %v1524, 64
  %v1556 = vpop.permute.xlu0 %1555
  %1557 = vrot.lane.b32.xlu0 %v1526, 64
  %v1558 = vpop.permute.xlu0 %1557
  %1559 = vrot.lane.b32.xlu0 %v1528, 64
  %v1560 = vpop.permute.xlu0 %1559
  %1561 = vrot.lane.b32.xlu0 %v1530, 64
  %v1562 = vpop.permute.xlu0 %1561
  %1563 = vrot.lane.b32.xlu0 %v1532, 64
  %v1564 = vpop.permute.xlu0 %1563
  %1565 = vrot.lane.b32.xlu0 %v1534, 64
  %v1566 = vpop.permute.xlu0 %1565
  %1567 = vrot.lane.b32.xlu0 %v1536, 64
  %v1568 = vpop.permute.xlu0 %1567
  %1569 = vrot.lane.b32.xlu0 %v1538, 64
  %v1570 = vpop.permute.xlu0 %1569
  %1571 = vrot.lane.b32.xlu0 %v1540, 64
  %v1572 = vpop.permute.xlu0 %1571
  %1573 = vrot.lane.b32.xlu0 %v1542, 64
  %v1574 = vpop.permute.xlu0 %1573
  %1575 = vrot.lane.b32.xlu0 %v1544, 64
  %v1576 = vpop.permute.xlu0 %1575
  %1577 = vrot.lane.b32.xlu0 %v1546, 64
  %v1578 = vpop.permute.xlu0 %1577
  %v1595 = vadd.f32 %v1497, %v1548
  %v1596 = vadd.f32 %v1498, %v1550
  %v1597 = vadd.f32 %v1499, %v1552
  %v1598 = vadd.f32 %v1500, %v1554
  %v1599 = vadd.f32 %v1501, %v1556
  %v1600 = vadd.f32 %v1502, %v1558
  %v1601 = vadd.f32 %v1503, %v1560
  %v1602 = vadd.f32 %v1504, %v1562
  %v1603 = vadd.f32 %v1505, %v1564
  %v1604 = vadd.f32 %v1506, %v1566
  %v1605 = vadd.f32 %v1507, %v1568
  %v1606 = vadd.f32 %v1508, %v1570
  %v1607 = vadd.f32 %v1509, %v1572
  %v1608 = vadd.f32 %v1510, %v1574
  %v1609 = vadd.f32 %v1511, %v1576
  %v1610 = vadd.f32 %v1512, %v1578
  %v1611 = vld [vmem:[%s2] sm:$0x1]
  %v1613 = vlaneseq
  %v1614 = vshrl.u32 %v1613, 7
  %v1615 = vsub.s32 0, %v1614
  %v1616 = vrot.slane %v1611, %v1615
  %v1618 = vadd.f32 %v1595, %v1616
  %v1619 = vadd.f32 %v1596, %v1616
  %v1620 = vadd.f32 %v1597, %v1616
  %v1621 = vadd.f32 %v1598, %v1616
  %v1622 = vadd.f32 %v1599, %v1616
  %v1623 = vadd.f32 %v1600, %v1616
  %v1624 = vadd.f32 %v1601, %v1616
  %v1625 = vadd.f32 %v1602, %v1616
  %v1626 = vadd.f32 %v1603, %v1616
  %v1627 = vadd.f32 %v1604, %v1616
  %v1628 = vadd.f32 %v1605, %v1616
  %v1629 = vadd.f32 %v1606, %v1616
  %v1630 = vadd.f32 %v1607, %v1616
  %v1631 = vadd.f32 %v1608, %v1616
  %v1632 = vadd.f32 %v1609, %v1616
  %v1633 = vadd.f32 %v1610, %v1616
  %v1634 = vmax.f32 %v1618, 0.0
  %v1635 = vmax.f32 %v1619, 0.0
  %v1636 = vmax.f32 %v1620, 0.0
  %v1637 = vmax.f32 %v1621, 0.0
  %v1638 = vmax.f32 %v1622, 0.0
  %v1639 = vmax.f32 %v1623, 0.0
  %v1640 = vmax.f32 %v1624, 0.0
  %v1641 = vmax.f32 %v1625, 0.0
  %v1642 = vmax.f32 %v1626, 0.0
  %v1643 = vmax.f32 %v1627, 0.0
  %v1644 = vmax.f32 %v1628, 0.0
  %v1645 = vmax.f32 %v1629, 0.0
  %v1646 = vmax.f32 %v1630, 0.0
  %v1647 = vmax.f32 %v1631, 0.0
  %v1648 = vmax.f32 %v1632, 0.0
  %v1649 = vmax.f32 %v1633, 0.0
  %v1650 = vpack.c.bf16 %v1635, %v1634
  %v1651 = vpack.c.bf16 %v1637, %v1636
  %v1652 = vpack.c.bf16 %v1639, %v1638
  %v1653 = vpack.c.bf16 %v1641, %v1640
  %v1654 = vpack.c.bf16 %v1643, %v1642
  %v1655 = vpack.c.bf16 %v1645, %v1644
  %v1656 = vpack.c.bf16 %v1647, %v1646
  %v1657 = vpack.c.bf16 %v1649, %v1648
  %vm1658 = vsmask.f32 7424
  %v1660 = vshrl.u32 %v1650, 16
  %v1662 = vshll.u32 %v1650, 16
  %v1664 = vrot.slane %v1662, 1
  %v1665 = vor.u32 %v1660, %v1664
  %v1667 = vshll.u32 %v1651, 16
  %v1669 = vrot.slane %v1667, 1
  %v1670 = vsel %vm1658, %v1665, %v1669
  %v1671 = vshrl.u32 %v1651, 16
  %v1673 = vor.u32 %v1671, %v1669
  %v1675 = vshll.u32 %v1652, 16
  %v1677 = vrot.slane %v1675, 1
  %v1678 = vsel %vm1658, %v1673, %v1677
  %v1679 = vshrl.u32 %v1652, 16
  %v1681 = vor.u32 %v1679, %v1677
  %v1683 = vshll.u32 %v1653, 16
  %v1685 = vrot.slane %v1683, 1
  %v1686 = vsel %vm1658, %v1681, %v1685
  %v1687 = vshrl.u32 %v1653, 16
  %v1689 = vor.u32 %v1687, %v1685
  %v1691 = vshll.u32 %v1654, 16
  %v1693 = vrot.slane %v1691, 1
  %v1694 = vsel %vm1658, %v1689, %v1693
  %v1695 = vshrl.u32 %v1654, 16
  %v1697 = vor.u32 %v1695, %v1693
  %v1699 = vshll.u32 %v1655, 16
  %v1701 = vrot.slane %v1699, 1
  %v1702 = vsel %vm1658, %v1697, %v1701
  %v1703 = vshrl.u32 %v1655, 16
  %v1705 = vor.u32 %v1703, %v1701
  %v1707 = vshll.u32 %v1656, 16
  %v1709 = vrot.slane %v1707, 1
  %v1710 = vsel %vm1658, %v1705, %v1709
  %v1711 = vshrl.u32 %v1656, 16
  %v1713 = vor.u32 %v1711, %v1709
  %v1715 = vshll.u32 %v1657, 16
  %v1717 = vrot.slane %v1715, 1
  %v1718 = vsel %vm1658, %v1713, %v1717
  %v1719 = vshrl.u32 %v1657, 16
  %v1721 = vor.u32 %v1719, %v1717
  %v1723 = vshll.u32 0, 16
  %v1725 = vrot.slane %v1723, 1
  %v1726 = vsel %vm1658, %v1721, %v1725
  %1727 = vrot.lane.b32.xlu0 %v1670, 32
  %v1728 = vpop.permute.xlu0 %1727
  %1729 = vrot.lane.b32.xlu0 %v1678, 32
  %v1730 = vpop.permute.xlu0 %1729
  %1731 = vrot.lane.b32.xlu0 %v1686, 32
  %v1732 = vpop.permute.xlu0 %1731
  %1733 = vrot.lane.b32.xlu0 %v1694, 32
  %v1734 = vpop.permute.xlu0 %1733
  %1735 = vrot.lane.b32.xlu0 %v1702, 32
  %v1736 = vpop.permute.xlu0 %1735
  %1737 = vrot.lane.b32.xlu0 %v1710, 32
  %v1738 = vpop.permute.xlu0 %1737
  %1739 = vrot.lane.b32.xlu0 %v1718, 32
  %v1740 = vpop.permute.xlu0 %1739
  %1741 = vrot.lane.b32.xlu0 %v1726, 32
  %v1742 = vpop.permute.xlu0 %1741
  %vm1752 = vcmask 1046528
  %v1753 = vrot.slane %v1650, 1
  %v1754 = vrot.slane %v1651, 1
  %v1755 = vsel %vm1752, %v1753, %v1754
  %v1756 = vrot.slane %v1652, 1
  %v1757 = vsel %vm1752, %v1754, %v1756
  %v1758 = vrot.slane %v1653, 1
  %v1759 = vsel %vm1752, %v1756, %v1758
  %v1760 = vrot.slane %v1654, 1
  %v1761 = vsel %vm1752, %v1758, %v1760
  %v1762 = vrot.slane %v1655, 1
  %v1763 = vsel %vm1752, %v1760, %v1762
  %v1764 = vrot.slane %v1656, 1
  %v1765 = vsel %vm1752, %v1762, %v1764
  %v1766 = vrot.slane %v1657, 1
  %v1767 = vsel %vm1752, %v1764, %v1766
  %v1768 = vrot.slane 0, 1
  %v1769 = vsel %vm1752, %v1766, %v1768
  %1770 = vrot.lane.b32.xlu0 %v1755, 64
  %v1771 = vpop.permute.xlu0 %1770
  %1772 = vrot.lane.b32.xlu0 %v1757, 64
  %v1773 = vpop.permute.xlu0 %1772
  %1774 = vrot.lane.b32.xlu0 %v1759, 64
  %v1775 = vpop.permute.xlu0 %1774
  %1776 = vrot.lane.b32.xlu0 %v1761, 64
  %v1777 = vpop.permute.xlu0 %1776
  %1778 = vrot.lane.b32.xlu0 %v1763, 64
  %v1779 = vpop.permute.xlu0 %1778
  %1780 = vrot.lane.b32.xlu0 %v1765, 64
  %v1781 = vpop.permute.xlu0 %1780
  %1782 = vrot.lane.b32.xlu0 %v1767, 64
  %v1783 = vpop.permute.xlu0 %1782
  %1784 = vrot.lane.b32.xlu0 %v1769, 64
  %v1785 = vpop.permute.xlu0 %1784
  %vm1786 = vcmask 261120
  %v1788 = vsel %vm1786, %v1650, %v1728
  %v1790 = vsel %vm1786, %v1651, %v1730
  %v1792 = vsel %vm1786, %v1652, %v1732
  %v1794 = vsel %vm1786, %v1653, %v1734
  %v1796 = vsel %vm1786, %v1654, %v1736
  %v1798 = vsel %vm1786, %v1655, %v1738
  %v1800 = vsel %vm1786, %v1656, %v1740
  %v1802 = vsel %vm1786, %v1657, %v1742
  %vm1803 = vcmask 523264
  %v1805 = vsel %vm1803, %v1788, %v1771
  %v1807 = vsel %vm1803, %v1790, %v1773
  %v1809 = vsel %vm1803, %v1792, %v1775
  %v1811 = vsel %vm1803, %v1794, %v1777
  %v1813 = vsel %vm1803, %v1796, %v1779
  %v1815 = vsel %vm1803, %v1798, %v1781
  %v1817 = vsel %vm1803, %v1800, %v1783
  %v1819 = vsel %vm1803, %v1802, %v1785
  %v1820 = vld [vmem:[%s3] sm:$0xf]
  %v1821 = vld [vmem:[%s3 + $0x4] sm:$0xf]
  %v1822 = vld [vmem:[%s3 + $0x8] sm:$0xf]
  %v1823 = vld [vmem:[%s3 + $0xc] sm:$0xf]
  %v1824 = vld [vmem:[%s3 + $0x10] sm:$0xf]
  %v1825 = vld [vmem:[%s3 + $0x14] sm:$0xf]
  %v1826 = vld [vmem:[%s3 + $0x18] sm:$0xf]
  %v1827 = vld [vmem:[%s3 + $0x1c] sm:$0xf]
  %v1828 = vld [vmem:[%s3 + $0x20] sm:$0xf]
  %v1829 = vld [vmem:[%s3 + $0x24] sm:$0xf]
  %v1830 = vld [vmem:[%s3 + $0x28] sm:$0xf]
  %v1831 = vld [vmem:[%s3 + $0x2c] sm:$0xf]
  %v1832 = vld [vmem:[%s4] sm:$0x1]
  %v1834 = vlaneseq
  %v1835 = vshrl.u32 %v1834, 7
  %v1836 = vsub.s32 0, %v1835
  %v1837 = vrot.slane %v1832, %v1836
  %v1851 = vunpack.c.l.b16 %v1820
  %v1852 = vunpack.c.l.b16 %v1821
  %v1853 = vunpack.c.l.b16 %v1822
  %v1854 = vunpack.c.l.b16 %v1823
  %v1855 = vunpack.c.l.b16 %v1824
  %v1856 = vunpack.c.l.b16 %v1825
  %v1857 = vunpack.c.l.b16 %v1826
  %v1858 = vunpack.c.l.b16 %v1827
  %v1859 = vunpack.c.l.b16 %v1828
  %v1860 = vunpack.c.l.b16 %v1829
  %v1861 = vunpack.c.l.b16 %v1830
  %v1862 = vunpack.c.l.b16 %v1831
  %v1863 = vpack.c.b16 %v1852, %v1851
  %v1864 = vpack.c.b16 %v1854, %v1853
  %v1865 = vpack.c.b16 %v1856, %v1855
  %v1866 = vpack.c.b16 %v1858, %v1857
  %v1867 = vpack.c.b16 %v1860, %v1859
  %v1868 = vpack.c.b16 %v1862, %v1861
  %vm1875 = vcmask 785408
  %v1876 = vsel %vm1875, %v1805, 0
  %v1878 = vsel %vm1875, %v1807, 0
  %v1880 = vsel %vm1875, %v1809, 0
  %v1882 = vsel %vm1875, %v1811, 0
  %v1884 = vsel %vm1875, %v1813, 0
  %v1886 = vsel %vm1875, %v1815, 0
  %v1888 = vsel %vm1875, %v1817, 0
  %v1890 = vsel %vm1875, %v1819, 0
  %1892 = vmatprep.subr.bf16.mxu0 0
  %1893 = vmatpush1.bf16.msra.mxu0 %v1863
  %1894 = vmatprep.subr.bf16.mxu0 0
  %1895 = vmatpush1.bf16.msra.mxu0 %v1864
  %1896 = vmatprep.subr.bf16.mxu0 0
  %1897 = vmatpush1.bf16.msra.mxu0 %v1865
  %1898 = vmatprep.subr.bf16.mxu0 0
  %1899 = vmatpush1.bf16.msra.mxu0 %v1866
  %1900 = vmatprep.subr.bf16.mxu0 0
  %1901 = vmatpush1.bf16.msra.mxu0 %v1867
  %1902 = vmatprep.subr.bf16.mxu0 0
  %1903 = vmatpush1.bf16.msra.mxu0 %v1868
  %1904 = vmatprep.subr.bf16.mxu0 0
  %1905 = vmatpush1.bf16.msra.mxu0 0
  %1906 = vmatprep.subr.bf16.mxu0 0
  %1907 = vmatpush1.bf16.msra.mxu0 0
  %1908 = vmatprep.subr.bf16.mxu0 0
  %1909 = vmatpush1.bf16.msra.mxu0 0
  %1910 = vmatprep.subr.bf16.mxu0 0
  %1911 = vmatpush1.bf16.msra.mxu0 0
  %1912 = vmatprep.subr.bf16.mxu0 0
  %1913 = vmatpush1.bf16.msra.mxu0 0
  %1914 = vmatprep.subr.bf16.mxu0 0
  %1915 = vmatpush1.bf16.msra.mxu0 0
  %1916 = vmatprep.subr.bf16.mxu0 0
  %1917 = vmatpush1.bf16.msra.mxu0 0
  %1918 = vmatprep.subr.bf16.mxu0 0
  %1919 = vmatpush1.bf16.msra.mxu0 0
  %1920 = vmatprep.subr.bf16.mxu0 0
  %1921 = vmatpush1.bf16.msra.mxu0 0
  %1922 = vmatprep.subr.bf16.mxu0 0
  %1923 = vmatpush1.bf16.msra.mxu0 0
  %1924 = vmatprep.mubr.bf16.mxu0 0
  %1925 = vmatmul.mubr.bf16.gmra.mrb[0].mxu0 %v1876
  %v1926 = vpop.f32.mrb[0].mxu0
  %v1927 = vadd.f32 %v1837, %v1926
  %v1928 = vpop.f32.mrb[0].mxu0
  %v1929 = vpop.f32.mrb[0].mxu0
  %v1930 = vadd.f32 %v1837, %v1929
  %v1931 = vpop.f32.mrb[0].mxu0
  %1932 = vmatprep.mubr.bf16.mxu0 0
  %1933 = vmatmul.mubr.bf16.gmra.mrb[0].mxu0 %v1878
  %v1934 = vpop.f32.mrb[0].mxu0
  %v1935 = vadd.f32 %v1837, %v1934
  %v1936 = vpop.f32.mrb[0].mxu0
  %v1937 = vpop.f32.mrb[0].mxu0
  %v1938 = vadd.f32 %v1837, %v1937
  %v1939 = vpop.f32.mrb[0].mxu0
  %1940 = vmatprep.mubr.bf16.mxu0 0
  %1941 = vmatmul.mubr.bf16.gmra.mrb[0].mxu0 %v1880
  %v1942 = vpop.f32.mrb[0].mxu0
  %v1943 = vadd.f32 %v1837, %v1942
  %v1944 = vpop.f32.mrb[0].mxu0
  %v1945 = vpop.f32.mrb[0].mxu0
  %v1946 = vadd.f32 %v1837, %v1945
  %v1947 = vpop.f32.mrb[0].mxu0
  %1948 = vmatprep.mubr.bf16.mxu0 0
  %1949 = vmatmul.mubr.bf16.gmra.mrb[0].mxu0 %v1882
  %v1950 = vpop.f32.mrb[0].mxu0
  %v1951 = vadd.f32 %v1837, %v1950
  %v1952 = vpop.f32.mrb[0].mxu0
  %v1953 = vpop.f32.mrb[0].mxu0
  %v1954 = vadd.f32 %v1837, %v1953
  %v1955 = vpop.f32.mrb[0].mxu0
  %1956 = vmatprep.mubr.bf16.mxu0 0
  %1957 = vmatmul.mubr.bf16.gmra.mrb[0].mxu0 %v1884
  %v1958 = vpop.f32.mrb[0].mxu0
  %v1959 = vadd.f32 %v1837, %v1958
  %v1960 = vpop.f32.mrb[0].mxu0
  %v1961 = vpop.f32.mrb[0].mxu0
  %v1962 = vadd.f32 %v1837, %v1961
  %v1963 = vpop.f32.mrb[0].mxu0
  %1964 = vmatprep.mubr.bf16.mxu0 0
  %1965 = vmatmul.mubr.bf16.gmra.mrb[0].mxu0 %v1886
  %v1966 = vpop.f32.mrb[0].mxu0
  %v1967 = vadd.f32 %v1837, %v1966
  %v1968 = vpop.f32.mrb[0].mxu0
  %v1969 = vpop.f32.mrb[0].mxu0
  %v1970 = vadd.f32 %v1837, %v1969
  %v1971 = vpop.f32.mrb[0].mxu0
  %1972 = vmatprep.mubr.bf16.mxu0 0
  %1973 = vmatmul.mubr.bf16.gmra.mrb[0].mxu0 %v1888
  %v1974 = vpop.f32.mrb[0].mxu0
  %v1975 = vadd.f32 %v1837, %v1974
  %v1976 = vpop.f32.mrb[0].mxu0
  %v1977 = vpop.f32.mrb[0].mxu0
  %v1978 = vadd.f32 %v1837, %v1977
  %v1979 = vpop.f32.mrb[0].mxu0
  %1980 = vmatprep.mubr.bf16.mxu0 0
  %1981 = vmatmul.mubr.bf16.gmra.mrb[0].mxu0 %v1890
  %v1982 = vpop.f32.mrb[0].mxu0
  %v1983 = vadd.f32 %v1837, %v1982
  %v1984 = vpop.f32.mrb[0].mxu0
  %v1985 = vpop.f32.mrb[0].mxu0
  %v1986 = vadd.f32 %v1837, %v1985
  %v1987 = vpop.f32.mrb[0].mxu0
  %1988 = vdwg.mxu0
  %v1989 = vmax.f32 %v1927, 0.0
  %v1990 = vmax.f32 %v1930, 0.0
  %v1991 = vmax.f32 %v1935, 0.0
  %v1992 = vmax.f32 %v1938, 0.0
  %v1993 = vmax.f32 %v1943, 0.0
  %v1994 = vmax.f32 %v1946, 0.0
  %v1995 = vmax.f32 %v1951, 0.0
  %v1996 = vmax.f32 %v1954, 0.0
  %v1997 = vmax.f32 %v1959, 0.0
  %v1998 = vmax.f32 %v1962, 0.0
  %v1999 = vmax.f32 %v1967, 0.0
  %v2000 = vmax.f32 %v1970, 0.0
  %v2001 = vmax.f32 %v1975, 0.0
  %v2002 = vmax.f32 %v1978, 0.0
  %v2003 = vmax.f32 %v1983, 0.0
  %v2004 = vmax.f32 %v1986, 0.0
  %v2005 = vpack.c.bf16 %v1990, %v1989
  %v2006 = vpack.c.bf16 %v1992, %v1991
  %v2007 = vpack.c.bf16 %v1994, %v1993
  %v2008 = vpack.c.bf16 %v1996, %v1995
  %v2009 = vpack.c.bf16 %v1998, %v1997
  %v2010 = vpack.c.bf16 %v2000, %v1999
  %v2011 = vpack.c.bf16 %v2002, %v2001
  %v2012 = vpack.c.bf16 %v2004, %v2003
  %v2014 = vshrl.u32 %v2005, 16
  %v2016 = vshll.u32 %v2005, 16
  %v2018 = vrot.slane %v2016, 1
  %v2019 = vor.u32 %v2014, %v2018
  %v2021 = vshll.u32 %v2006, 16
  %v2023 = vrot.slane %v2021, 1
  %v2024 = vsel %vm1658, %v2019, %v2023
  %v2025 = vshrl.u32 %v2006, 16
  %v2027 = vor.u32 %v2025, %v2023
  %v2029 = vshll.u32 %v2007, 16
  %v2031 = vrot.slane %v2029, 1
  %v2032 = vsel %vm1658, %v2027, %v2031
  %v2033 = vshrl.u32 %v2007, 16
  %v2035 = vor.u32 %v2033, %v2031
  %v2037 = vshll.u32 %v2008, 16
  %v2039 = vrot.slane %v2037, 1
  %v2040 = vsel %vm1658, %v2035, %v2039
  %v2041 = vshrl.u32 %v2008, 16
  %v2043 = vor.u32 %v2041, %v2039
  %v2045 = vshll.u32 %v2009, 16
  %v2047 = vrot.slane %v2045, 1
  %v2048 = vsel %vm1658, %v2043, %v2047
  %v2049 = vshrl.u32 %v2009, 16
  %v2051 = vor.u32 %v2049, %v2047
  %v2053 = vshll.u32 %v2010, 16
  %v2055 = vrot.slane %v2053, 1
  %v2056 = vsel %vm1658, %v2051, %v2055
  %v2057 = vshrl.u32 %v2010, 16
  %v2059 = vor.u32 %v2057, %v2055
  %v2061 = vshll.u32 %v2011, 16
  %v2063 = vrot.slane %v2061, 1
  %v2064 = vsel %vm1658, %v2059, %v2063
  %v2065 = vshrl.u32 %v2011, 16
  %v2067 = vor.u32 %v2065, %v2063
  %v2069 = vshll.u32 %v2012, 16
  %v2071 = vrot.slane %v2069, 1
  %v2072 = vsel %vm1658, %v2067, %v2071
  %v2073 = vshrl.u32 %v2012, 16
  %v2075 = vor.u32 %v2073, %v2071
  %v2076 = vsel %vm1658, %v2075, %v1725
  %2077 = vrot.lane.b32.xlu0 %v2024, 64
  %v2078 = vpop.permute.xlu0 %2077
  %2079 = vrot.lane.b32.xlu0 %v2032, 64
  %v2080 = vpop.permute.xlu0 %2079
  %2081 = vrot.lane.b32.xlu0 %v2040, 64
  %v2082 = vpop.permute.xlu0 %2081
  %2083 = vrot.lane.b32.xlu0 %v2048, 64
  %v2084 = vpop.permute.xlu0 %2083
  %2085 = vrot.lane.b32.xlu0 %v2056, 64
  %v2086 = vpop.permute.xlu0 %2085
  %2087 = vrot.lane.b32.xlu0 %v2064, 64
  %v2088 = vpop.permute.xlu0 %2087
  %2089 = vrot.lane.b32.xlu0 %v2072, 64
  %v2090 = vpop.permute.xlu0 %2089
  %2091 = vrot.lane.b32.xlu0 %v2076, 64
  %v2092 = vpop.permute.xlu0 %2091
  %v2101 = vrot.slane %v2005, 1
  %v2102 = vrot.slane %v2006, 1
  %v2103 = vsel %vm1752, %v2101, %v2102
  %v2104 = vrot.slane %v2007, 1
  %v2105 = vsel %vm1752, %v2102, %v2104
  %v2106 = vrot.slane %v2008, 1
  %v2107 = vsel %vm1752, %v2104, %v2106
  %v2108 = vrot.slane %v2009, 1
  %v2109 = vsel %vm1752, %v2106, %v2108
  %v2110 = vrot.slane %v2010, 1
  %v2111 = vsel %vm1752, %v2108, %v2110
  %v2112 = vrot.slane %v2011, 1
  %v2113 = vsel %vm1752, %v2110, %v2112
  %v2114 = vrot.slane %v2012, 1
  %v2115 = vsel %vm1752, %v2112, %v2114
  %v2116 = vsel %vm1752, %v2114, %v1768
  %v2118 = vsel %vm1803, %v2005, %v2078
  %v2121 = vsel %vm1803, %v2006, %v2080
  %v2124 = vsel %vm1803, %v2007, %v2082
  %v2127 = vsel %vm1803, %v2008, %v2084
  %v2130 = vsel %vm1803, %v2009, %v2086
  %v2133 = vsel %vm1803, %v2010, %v2088
  %v2136 = vsel %vm1803, %v2011, %v2090
  %v2139 = vsel %vm1803, %v2012, %v2092
  %v2141 = vld [vmem:[%s5] sm:$0xf]
  %v2142 = vld [vmem:[%s5 + $0x4] sm:$0xf]
  %v2143 = vld [vmem:[%s5 + $0x8] sm:$0xf]
  %v2144 = vld [vmem:[%s5 + $0xc] sm:$0xf]
  %v2145 = vld [vmem:[%s5 + $0x10] sm:$0xf]
  %v2146 = vld [vmem:[%s5 + $0x14] sm:$0xf]
  %v2147 = vld [vmem:[%s5 + $0x18] sm:$0xf]
  %v2148 = vld [vmem:[%s5 + $0x1c] sm:$0xf]
  %v2149 = vld [vmem:[%s5 + $0x20] sm:$0xf]
  %v2150 = vld [vmem:[%s5 + $0x24] sm:$0xf]
  %v2151 = vld [vmem:[%s5 + $0x28] sm:$0xf]
  %v2152 = vld [vmem:[%s5 + $0x2c] sm:$0xf]
  %v2153 = vld [vmem:[%s5 + $0x30] sm:$0xf]
  %v2154 = vld [vmem:[%s5 + $0x34] sm:$0xf]
  %v2155 = vld [vmem:[%s5 + $0x38] sm:$0xf]
  %v2156 = vld [vmem:[%s5 + $0x3c] sm:$0xf]
  %v2157 = vld [vmem:[%s5 + $0x40] sm:$0xf]
  %v2158 = vld [vmem:[%s5 + $0x44] sm:$0xf]
  %v2159 = vld [vmem:[%s5 + $0x48] sm:$0xf]
  %v2160 = vld [vmem:[%s5 + $0x4c] sm:$0xf]
  %v2161 = vld [vmem:[%s5 + $0x50] sm:$0xf]
  %v2162 = vld [vmem:[%s5 + $0x54] sm:$0xf]
  %v2163 = vld [vmem:[%s5 + $0x58] sm:$0xf]
  %v2164 = vld [vmem:[%s5 + $0x5c] sm:$0xf]
  %v2165 = vld [vmem:[%s6] sm:$0x1]
  %v2167 = vlaneseq
  %v2168 = vshrl.u32 %v2167, 7
  %v2169 = vsub.s32 0, %v2168
  %v2170 = vrot.slane %v2165, %v2169
  %v2196 = vunpack.c.l.b16 %v2141
  %v2197 = vunpack.c.l.b16 %v2142
  %v2198 = vunpack.c.l.b16 %v2143
  %v2199 = vunpack.c.l.b16 %v2144
  %v2200 = vunpack.c.l.b16 %v2145
  %v2201 = vunpack.c.l.b16 %v2146
  %v2202 = vunpack.c.l.b16 %v2147
  %v2203 = vunpack.c.l.b16 %v2148
  %v2204 = vunpack.c.l.b16 %v2149
  %v2205 = vunpack.c.l.b16 %v2150
  %v2206 = vunpack.c.l.b16 %v2151
  %v2207 = vunpack.c.l.b16 %v2152
  %v2208 = vunpack.c.l.b16 %v2153
  %v2209 = vunpack.c.l.b16 %v2154
  %v2210 = vunpack.c.l.b16 %v2155
  %v2211 = vunpack.c.l.b16 %v2156
  %v2212 = vunpack.c.l.b16 %v2157
  %v2213 = vunpack.c.l.b16 %v2158
  %v2214 = vunpack.c.l.b16 %v2159
  %v2215 = vunpack.c.l.b16 %v2160
  %v2216 = vunpack.c.l.b16 %v2161
  %v2217 = vunpack.c.l.b16 %v2162
  %v2218 = vunpack.c.l.b16 %v2163
  %v2219 = vunpack.c.l.b16 %v2164
  %v2220 = vpack.c.b16 %v2197, %v2196
  %v2221 = vpack.c.b16 %v2199, %v2198
  %v2222 = vpack.c.b16 %v2201, %v2200
  %v2223 = vpack.c.b16 %v2203, %v2202
  %v2224 = vpack.c.b16 %v2205, %v2204
  %v2225 = vpack.c.b16 %v2207, %v2206
  %v2226 = vpack.c.b16 %v2209, %v2208
  %v2227 = vpack.c.b16 %v2211, %v2210
  %v2228 = vpack.c.b16 %v2213, %v2212
  %v2229 = vpack.c.b16 %v2215, %v2214
  %v2230 = vpack.c.b16 %v2217, %v2216
  %v2231 = vpack.c.b16 %v2219, %v2218
  %v2245 = vsel %vm1803, %v2103, 0
  %v2248 = vsel %vm1803, %v2105, 0
  %v2251 = vsel %vm1803, %v2107, 0
  %v2254 = vsel %vm1803, %v2109, 0
  %v2257 = vsel %vm1803, %v2111, 0
  %v2260 = vsel %vm1803, %v2113, 0
  %v2263 = vsel %vm1803, %v2115, 0
  %v2266 = vsel %vm1803, %v2116, 0
  %2268 = vmatprep.subr.bf16.mxu0 0
  %2269 = vmatpush1.bf16.msra.mxu0 %v2220
  %2270 = vmatprep.subr.bf16.mxu0 0
  %2271 = vmatpush1.bf16.msra.mxu0 %v2221
  %2272 = vmatprep.subr.bf16.mxu0 0
  %2273 = vmatpush1.bf16.msra.mxu0 %v2222
  %2274 = vmatprep.subr.bf16.mxu0 0
  %2275 = vmatpush1.bf16.msra.mxu0 %v2223
  %2276 = vmatprep.subr.bf16.mxu0 0
  %2277 = vmatpush1.bf16.msra.mxu0 %v2224
  %2278 = vmatprep.subr.bf16.mxu0 0
  %2279 = vmatpush1.bf16.msra.mxu0 %v2225
  %2280 = vmatprep.subr.bf16.mxu0 0
  %2281 = vmatpush1.bf16.msra.mxu0 %v2226
  %2282 = vmatprep.subr.bf16.mxu0 0
  %2283 = vmatpush1.bf16.msra.mxu0 %v2227
  %2284 = vmatprep.subr.bf16.mxu0 0
  %2285 = vmatpush1.bf16.msra.mxu0 %v2228
  %2286 = vmatprep.subr.bf16.mxu0 0
  %2287 = vmatpush1.bf16.msra.mxu0 %v2229
  %2288 = vmatprep.subr.bf16.mxu0 0
  %2289 = vmatpush1.bf16.msra.mxu0 %v2230
  %2290 = vmatprep.subr.bf16.mxu0 0
  %2291 = vmatpush1.bf16.msra.mxu0 %v2231
  %2292 = vmatprep.subr.bf16.mxu0 0
  %2293 = vmatpush1.bf16.msra.mxu0 0
  %2294 = vmatprep.subr.bf16.mxu0 0
  %2295 = vmatpush1.bf16.msra.mxu0 0
  %2296 = vmatprep.subr.bf16.mxu0 0
  %2297 = vmatpush1.bf16.msra.mxu0 0
  %2298 = vmatprep.subr.bf16.mxu0 0
  %2299 = vmatpush1.bf16.msra.mxu0 0
  %2300 = vmatprep.mubr.bf16.mxu0 %v2245
  %2301 = vmatmul.mubr.bf16.gmra.mrb[0].mxu0 %v2118
  %v2302 = vpop.f32.mrb[0].mxu0
  %v2303 = vadd.f32 %v2170, %v2302
  %v2304 = vpop.f32.mrb[0].mxu0
  %v2305 = vpop.f32.mrb[0].mxu0
  %v2306 = vadd.f32 %v2170, %v2305
  %v2307 = vpop.f32.mrb[0].mxu0
  %2308 = vmatprep.mubr.bf16.mxu0 %v2248
  %2309 = vmatmul.mubr.bf16.gmra.mrb[0].mxu0 %v2121
  %v2310 = vpop.f32.mrb[0].mxu0
  %v2311 = vadd.f32 %v2170, %v2310
  %v2312 = vpop.f32.mrb[0].mxu0
  %v2313 = vpop.f32.mrb[0].mxu0
  %v2314 = vadd.f32 %v2170, %v2313
  %v2315 = vpop.f32.mrb[0].mxu0
  %2316 = vmatprep.mubr.bf16.mxu0 %v2251
  %2317 = vmatmul.mubr.bf16.gmra.mrb[0].mxu0 %v2124
  %v2318 = vpop.f32.mrb[0].mxu0
  %v2319 = vadd.f32 %v2170, %v2318
  %v2320 = vpop.f32.mrb[0].mxu0
  %v2321 = vpop.f32.mrb[0].mxu0
  %v2322 = vadd.f32 %v2170, %v2321
  %v2323 = vpop.f32.mrb[0].mxu0
  %2324 = vmatprep.mubr.bf16.mxu0 %v2254
  %2325 = vmatmul.mubr.bf16.gmra.mrb[0].mxu0 %v2127
  %v2326 = vpop.f32.mrb[0].mxu0
  %v2327 = vadd.f32 %v2170, %v2326
  %v2328 = vpop.f32.mrb[0].mxu0
  %v2329 = vpop.f32.mrb[0].mxu0
  %v2330 = vadd.f32 %v2170, %v2329
  %v2331 = vpop.f32.mrb[0].mxu0
  %2332 = vmatprep.mubr.bf16.mxu0 %v2257
  %2333 = vmatmul.mubr.bf16.gmra.mrb[0].mxu0 %v2130
  %v2334 = vpop.f32.mrb[0].mxu0
  %v2335 = vadd.f32 %v2170, %v2334
  %v2336 = vpop.f32.mrb[0].mxu0
  %v2337 = vpop.f32.mrb[0].mxu0
  %v2338 = vadd.f32 %v2170, %v2337
  %v2339 = vpop.f32.mrb[0].mxu0
  %2340 = vmatprep.mubr.bf16.mxu0 %v2260
  %2341 = vmatmul.mubr.bf16.gmra.mrb[0].mxu0 %v2133
  %v2342 = vpop.f32.mrb[0].mxu0
  %v2343 = vadd.f32 %v2170, %v2342
  %v2344 = vpop.f32.mrb[0].mxu0
  %v2345 = vpop.f32.mrb[0].mxu0
  %v2346 = vadd.f32 %v2170, %v2345
  %v2347 = vpop.f32.mrb[0].mxu0
  %2348 = vmatprep.mubr.bf16.mxu0 %v2263
  %2349 = vmatmul.mubr.bf16.gmra.mrb[0].mxu0 %v2136
  %v2350 = vpop.f32.mrb[0].mxu0
  %v2351 = vadd.f32 %v2170, %v2350
  %v2352 = vpop.f32.mrb[0].mxu0
  %v2353 = vpop.f32.mrb[0].mxu0
  %v2354 = vadd.f32 %v2170, %v2353
  %v2355 = vpop.f32.mrb[0].mxu0
  %2356 = vmatprep.mubr.bf16.mxu0 %v2266
  %2357 = vmatmul.mubr.bf16.gmra.mrb[0].mxu0 %v2139
  %v2358 = vpop.f32.mrb[0].mxu0
  %v2359 = vadd.f32 %v2170, %v2358
  %v2360 = vpop.f32.mrb[0].mxu0
  %v2361 = vpop.f32.mrb[0].mxu0
  %v2362 = vadd.f32 %v2170, %v2361
  %v2363 = vpop.f32.mrb[0].mxu0
  %2364 = vdwg.mxu0
  %v2365 = vmax.f32 %v2303, 0.0
  %v2366 = vmax.f32 %v2306, 0.0
  %v2367 = vmax.f32 %v2311, 0.0
  %v2368 = vmax.f32 %v2314, 0.0
  %v2369 = vmax.f32 %v2319, 0.0
  %v2370 = vmax.f32 %v2322, 0.0
  %v2371 = vmax.f32 %v2327, 0.0
  %v2372 = vmax.f32 %v2330, 0.0
  %v2373 = vmax.f32 %v2335, 0.0
  %v2374 = vmax.f32 %v2338, 0.0
  %v2375 = vmax.f32 %v2343, 0.0
  %v2376 = vmax.f32 %v2346, 0.0
  %v2377 = vmax.f32 %v2351, 0.0
  %v2378 = vmax.f32 %v2354, 0.0
  %v2379 = vmax.f32 %v2359, 0.0
  %v2380 = vmax.f32 %v2362, 0.0
  %v2381 = vld [vmem:[%s7] sm:$0x1]
  %v2383 = vlaneseq
  %v2384 = vshrl.u32 %v2383, 7
  %v2385 = vsub.s32 0, %v2384
  %v2386 = vrot.slane %v2381, %v2385
  %v2388 = vmul.f32 %v2365, %v2386
  %v2389 = vmul.f32 %v2366, %v2386
  %v2390 = vmul.f32 %v2367, %v2386
  %v2391 = vmul.f32 %v2368, %v2386
  %v2392 = vmul.f32 %v2369, %v2386
  %v2393 = vmul.f32 %v2370, %v2386
  %v2394 = vmul.f32 %v2371, %v2386
  %v2395 = vmul.f32 %v2372, %v2386
  %v2396 = vmul.f32 %v2373, %v2386
  %v2397 = vmul.f32 %v2374, %v2386
  %v2398 = vmul.f32 %v2375, %v2386
  %v2399 = vmul.f32 %v2376, %v2386
  %v2400 = vmul.f32 %v2377, %v2386
  %v2401 = vmul.f32 %v2378, %v2386
  %v2402 = vmul.f32 %v2379, %v2386
  %v2403 = vmul.f32 %v2380, %v2386
  %v2404 = vld [vmem:[%s8] sm:$0x1]
  %v2406 = vlaneseq
  %v2407 = vshrl.u32 %v2406, 7
  %v2408 = vsub.s32 0, %v2407
  %v2409 = vrot.slane %v2404, %v2408
  %v2411 = vadd.f32 %v2388, %v2409
  %v2412 = vadd.f32 %v2389, %v2409
  %v2413 = vadd.f32 %v2390, %v2409
  %v2414 = vadd.f32 %v2391, %v2409
  %v2415 = vadd.f32 %v2392, %v2409
  %v2416 = vadd.f32 %v2393, %v2409
  %v2417 = vadd.f32 %v2394, %v2409
  %v2418 = vadd.f32 %v2395, %v2409
  %v2419 = vadd.f32 %v2396, %v2409
  %v2420 = vadd.f32 %v2397, %v2409
  %v2421 = vadd.f32 %v2398, %v2409
  %v2422 = vadd.f32 %v2399, %v2409
  %v2423 = vadd.f32 %v2400, %v2409
  %v2424 = vadd.f32 %v2401, %v2409
  %v2425 = vadd.f32 %v2402, %v2409
  %v2426 = vadd.f32 %v2403, %v2409
  %2427 = vst [vmem:[%s9] sm:$0xff] %v2411
  %2428 = vst [vmem:[%s9 + $0x8] sm:$0xff] %v2412
  %2429 = vst [vmem:[%s9 + $0x10] sm:$0xff] %v2413
  %2430 = vst [vmem:[%s9 + $0x18] sm:$0xff] %v2414
  %2431 = vst [vmem:[%s9 + $0x20] sm:$0xff] %v2415
  %2432 = vst [vmem:[%s9 + $0x28] sm:$0xff] %v2416
  %2433 = vst [vmem:[%s9 + $0x30] sm:$0xff] %v2417
  %2434 = vst [vmem:[%s9 + $0x38] sm:$0xff] %v2418
  %2435 = vst [vmem:[%s9 + $0x40] sm:$0xff] %v2419
  %2436 = vst [vmem:[%s9 + $0x48] sm:$0xff] %v2420
  %2437 = vst [vmem:[%s9 + $0x50] sm:$0xff] %v2421
  %2438 = vst [vmem:[%s9 + $0x58] sm:$0xff] %v2422
  %2439 = vst [vmem:[%s9 + $0x60] sm:$0xff] %v2423
  %2440 = vst [vmem:[%s9 + $0x68] sm:$0xff] %v2424
  %2441 = vst [vmem:[%s9 + $0x70] sm:$0xff] %v2425
  %2442 = vst [vmem:[%s9 + $0x78] sm:$0xff] %v2426
  // Predicated region
  $region38: #{peptide_cnn_forward.1} parent=0 // pred_check
    _
  $region39: #{peptide_cnn_forward.1} parent=0 // pred_check_branch
    %2444 = sbr.rel (0) target = $region41
  $region40: #{peptide_cnn_forward.1} parent=0 // pred_region
    _
  $region41: #{peptide_cnn_forward.1} parent=0 // pred_fallthru
    _
  // Predicated region
  $region42: #{peptide_cnn_forward.1} parent=0 // pred_check
    _
  $region43: #{peptide_cnn_forward.1} parent=0 // pred_check_branch
    %2446 = sbr.rel (0) target = $region45
  $region44: #{peptide_cnn_forward.1} parent=0 // pred_region
    _
  $region45: #{peptide_cnn_forward.1} parent=0 // pred_fallthru
    _

</llo_original>
